<compile_context>
chip_gen: v6e
topology: v6e:2x2x1
jax: 0.10.0
libtpu: 0.0.40
codegen_flags: <defaults>
</compile_context>

<pallas_src>
import math
import functools

import jax
import jax.numpy as jnp
from jax import lax
from jax.experimental import pallas as pl
from jax.experimental.pallas import tpu as pltpu

LN_EPS = 1e-5  # nn.LayerNorm default


def _round_up(x, m):
    return ((x + m - 1) // m) * m


def _gelu(x, approximate):
    if approximate:
        # tanh GELU: transcendental runs on the EUP slot (VALU relief on v5e).
        return jax.nn.gelu(x, approximate=True)
    # exact (erf) GELU == torch.nn.functional.gelu default
    return 0.5 * x * (1.0 + lax.erf(x * (1.0 / math.sqrt(2.0))))


def _tpu_config():
    """(vmem_capacity_bytes, tensorcores_per_chip), conservative on failure."""
    vmem = None
    try:
        vmem = int(pltpu.get_tpu_info().vmem_capacity_bytes)
    except Exception:
        vmem = None
    kind = ""
    try:
        kind = jax.devices()[0].device_kind.lower()
    except Exception:
        pass
    if "7" in kind:                       # v7x: 2 TCs/chip, 64 MiB VMEM per TC
        return (vmem or (64 << 20)), 2
    if "v5" in kind or "v6" in kind:      # v5e/v5p/v6e: 1 TC, 128 MiB VMEM
        return (vmem or (128 << 20)), 1
    # unknown: assume megacore + small VMEM (safe on every generation)
    return (vmem or (64 << 20)), 2


def mlp_adapter_kernel(x_ref, wd_ref, bd_ref, wm_ref, bm_ref, wu_ref, bu_ref,
                       gamma_ref, beta_ref, o_ref, *, approx_gelu, h_true):
    x_in = x_ref[...]

    # down_proj + GELU.  Cast the activation tile to the weight dtype so the
    # largest matmul takes the native MXU path; f32 accumulation throughout.
    h = jnp.dot(x_in.astype(wd_ref.dtype), wd_ref[...],
                preferred_element_type=jnp.float32)
    h = h + bd_ref[...].astype(jnp.float32)
    h = _gelu(h, approx_gelu)

    # middle_layer + GELU
    h = jnp.dot(h.astype(wm_ref.dtype), wm_ref[...],
                preferred_element_type=jnp.float32)
    h = h + bm_ref[...].astype(jnp.float32)
    h = _gelu(h, approx_gelu)

    # up_proj
    h = jnp.dot(h.astype(wu_ref.dtype), wu_ref[...],
                preferred_element_type=jnp.float32)
    h = h + bu_ref[...].astype(jnp.float32)

    # dropout: module evaluated in inference mode -> identity.
    # TODO(synk): training-mode dropout (pltpu.prng_* mask) not implemented.

    # residual add + two-pass LayerNorm over the true hidden width (f32).
    y = x_in.astype(jnp.float32) + h
    inv_n = 1.0 / h_true
    mean = jnp.sum(y, axis=-1, keepdims=True) * inv_n
    d = y - mean
    if h_true != y.shape[-1]:
        # Hidden dim was zero-padded for lane density: padded columns of y are
        # exactly 0, but (y - mean) is not -- mask them out of the variance.
        col = lax.broadcasted_iota(jnp.int32, y.shape, y.ndim - 1)
        d = jnp.where(col < h_true, d, 0.0)
    var = jnp.sum(d * d, axis=-1, keepdims=True) * inv_n
    inv = lax.rsqrt(var + LN_EPS)
    out = d * inv * gamma_ref[...].astype(jnp.float32) \
        + beta_ref[...].astype(jnp.float32)

    o_ref[...] = out.astype(o_ref.dtype)


@functools.partial(
    jax.jit,
    static_argnames=("row_tile", "approx_gelu", "single_buffer_weights",
                     "allow_weight_downcast"))
def mlp_adapter_forward(hidden_states, params, row_tile=None, approx_gelu=False,
                        single_buffer_weights=True, allow_weight_downcast=True):
    """hidden_states: (B, S, H). params: dict of (in, out)-layout weights."""
    B, S, H = hidden_states.shape
    Bk = params["wd"].shape[1]
    M = B * S
    x_itemsize = hidden_states.dtype.itemsize

    vmem_cap, n_cores = _tpu_config()
    # Headroom for compiler-internal scratch: ~48 MiB budget on v7x (64 MiB
    # physical per TC), ~102 MiB on v5e/v6e (128 MiB physical).
    budget = max(min(vmem_cap - (16 << 20), int(0.8 * vmem_cap)), 24 << 20)

    # --- pad bottleneck (always) and hidden (toy shapes only) to 128 --------
    H_pad = _round_up(H, 128)
    Bk_pad = _round_up(Bk, 128)

    def pad2(a, r, c):
        pr, pc = r - a.shape[0], c - a.shape[1]
        return jnp.pad(a, ((0, pr), (0, pc))) if (pr or pc) else a

    wd = pad2(params["wd"], H_pad, Bk_pad)
    bd = pad2(params["bd"], 1, Bk_pad)
    wm = pad2(params["wm"], Bk_pad, Bk_pad)
    bm = pad2(params["bm"], 1, Bk_pad)
    wu = pad2(params["wu"], Bk_pad, H_pad)
    bu = pad2(params["bu"], 1, H_pad)
    gamma = pad2(params["gamma"], 1, H_pad)
    beta = pad2(params["beta"], 1, H_pad)

    # v7x fit: if f32 matmul weights still blow the budget single-buffered,
    # downcast them to bf16 (halves residency + DMA, full-rate MXU path).
    if (allow_weight_downcast and vmem_cap <= (64 << 20)
            and wd.dtype == jnp.float32):
        f32_w = sum(int(math.prod(w.shape)) * 4 for w in (wd, wm, wu))
        if f32_w > (24 << 20):
            wd, wm, wu = (w.astype(jnp.bfloat16) for w in (wd, wm, wu))

    const_params = (wd, bd, wm, bm, wu, bu, gamma, beta)
    single_buf = single_buffer_weights and hasattr(pl, "Buffered")
    w_buf = 1 if single_buf else 2
    w_bytes = w_buf * sum(int(math.prod(p.shape)) * p.dtype.itemsize
                          for p in const_params)

    # --- row tile: dtype-aware sublane multiple, generation-aware size ------
    sub = {4: 8, 2: 16, 1: 32}.get(x_itemsize, 8)

    def vmem_estimate(t):
        io = 2 * 2 * t * H_pad * x_itemsize                 # in+out, 2-deep
        scratch = 4 * t * (2 * Bk_pad + 3 * H_pad)          # f32 intermediates
        return int(1.25 * (io + w_bytes + scratch)) + (2 << 20)

    max_tile = row_tile if row_tile is not None else \
        (512 if vmem_cap >= (96 << 20) else 256)
    tile = max(sub, min(_round_up(max_tile, sub), _round_up(M, sub)))
    while tile > sub and vmem_estimate(tile) > budget:
        tile = max(sub, _round_up(tile // 2, sub))
    if n_cores >= 2:
        # Megacore: make sure the row grid has at least one step per core.
        while tile > sub and (M + tile - 1) // tile < n_cores:
            tile = max(sub, _round_up(tile // 2, sub))
    grid_m = (M + tile - 1) // tile
    vmem_limit = int(min(max(vmem_estimate(tile), 16 << 20), budget))

    # --- inputs --------------------------------------------------------------
    x2d = hidden_states.reshape(M, H)
    if H_pad != H:
        # Toy shapes only (H < 128): pad for lane-dense stores.  Real hidden
        # sizes are already 128-multiples, so this extra HBM pass never runs.
        x2d = jnp.pad(x2d, ((0, 0), (0, H_pad - H)))
    # No row padding: ragged last block is handled by Pallas store masking.
    # Safe only because every op here is strictly row-wise -- do NOT add
    # cross-row reductions without re-introducing row padding.

    def const_spec(shape):
        if single_buf:
            return pl.BlockSpec(shape, lambda i: (0, 0),
                                pipeline_mode=pl.Buffered(1))
        return pl.BlockSpec(shape, lambda i: (0, 0))

    kernel = functools.partial(mlp_adapter_kernel,
                               approx_gelu=approx_gelu, h_true=H)

    out2d = pl.pallas_call(
        kernel,
        out_shape=jax.ShapeDtypeStruct((M, H_pad), hidden_states.dtype),
        grid_spec=pltpu.PrefetchScalarGridSpec(
            num_scalar_prefetch=0,
            grid=(grid_m,),
            in_specs=[
                pl.BlockSpec((tile, H_pad), lambda i: (i, 0)),  # x rows
                const_spec((H_pad, Bk_pad)),    # down_proj weight (in, out)
                const_spec((1, Bk_pad)),        # down_proj bias
                const_spec((Bk_pad, Bk_pad)),   # middle weight
                const_spec((1, Bk_pad)),        # middle bias
                const_spec((Bk_pad, H_pad)),    # up_proj weight
                const_spec((1, H_pad)),         # up_proj bias
                const_spec((1, H_pad)),         # layer_norm gamma
                const_spec((1, H_pad)),         # layer_norm beta
            ],
            out_specs=pl.BlockSpec((tile, H_pad), lambda i: (i, 0)),
        ),
        compiler_params=pltpu.CompilerParams(
            dimension_semantics=("parallel",),
            vmem_limit_bytes=vmem_limit,
        ),
    )(x2d, *const_params)

    if H_pad != H:
        out2d = out2d[:, :H]
    return out2d.reshape(B, S, H)


def init_params(key, hidden_size, bottleneck_size, adapter_init_scale=0.001,
                weight_dtype=jnp.float32):
    """PyTorch Linear stores (out, in); we keep the transposed (in, out) layout.
    For production inference pass weight_dtype=jnp.bfloat16 (full-rate MXU)."""
    kd, km, ku = jax.random.split(key, 3)
    wd = (adapter_init_scale *
          jax.random.normal(kd, (hidden_size, bottleneck_size), jnp.float32))
    wm = (adapter_init_scale *
          jax.random.normal(km, (bottleneck_size, bottleneck_size), jnp.float32))
    wu = (adapter_init_scale *
          jax.random.normal(ku, (bottleneck_size, hidden_size), jnp.float32))
    return {
        "wd": wd.astype(weight_dtype),
        "bd": jnp.zeros((1, bottleneck_size), jnp.float32),
        "wm": wm.astype(weight_dtype),
        "bm": jnp.zeros((1, bottleneck_size), jnp.float32),
        "wu": wu.astype(weight_dtype),
        "bu": jnp.zeros((1, hidden_size), jnp.float32),
        "gamma": jnp.ones((1, hidden_size), jnp.float32),
        "beta": jnp.zeros((1, hidden_size), jnp.float32),
    }


def _reference(hidden_states, params):
    """Pure-JAX reference matching the PyTorch forward (eval mode)."""
    x = hidden_states.astype(jnp.float32)
    h = x @ params["wd"].astype(jnp.float32) + params["bd"]
    h = 0.5 * h * (1.0 + lax.erf(h / math.sqrt(2.0)))
    h = h @ params["wm"].astype(jnp.float32) + params["bm"]
    h = 0.5 * h * (1.0 + lax.erf(h / math.sqrt(2.0)))
    h = h @ params["wu"].astype(jnp.float32) + params["bu"]
    y = x + h
    mean = jnp.mean(y, axis=-1, keepdims=True)
    var = jnp.mean((y - mean) ** 2, axis=-1, keepdims=True)
    return (y - mean) * lax.rsqrt(var + LN_EPS) * params["gamma"] + params["beta"]


if __name__ == "__main__":
    hidden_size = 32
    bottleneck_size = 64
    batch, seq = 2, 8

    key = jax.random.PRNGKey(0)
    kx, kp = jax.random.split(key)
    hidden_states = jax.random.normal(kx, (batch, seq, hidden_size), jnp.float32)
    params = init_params(kp, hidden_size, bottleneck_size)

    try:
        out = mlp_adapter_forward(hidden_states, params)
    except Exception:
        # Fallback if this jax build rejects single-buffered (Buffered(1))
        # constant BlockSpecs: rerun with default double-buffering.
        out = mlp_adapter_forward(hidden_states, params,
                                  single_buffer_weights=False)
    jax.block_until_ready(out)

    ref = _reference(hidden_states, params)
    assert out.shape == (batch, seq, hidden_size)
    assert jnp.all(jnp.isfinite(out))
    assert jnp.allclose(out.astype(jnp.float32), ref, rtol=1e-4, atol=1e-4)
    print("KERNEL_OK")
</pallas_src>

<mosaic_0001>
module attributes {stable_mosaic.version = 11 : i64} {
  func.func @mlp_adapter_kernel(%arg0: i32, %arg1: memref<8x128xf32, #tpu.memory_space<vmem>>, %arg2: memref<128x128xf32, #tpu.memory_space<vmem>>, %arg3: memref<1x128xf32, #tpu.memory_space<vmem>>, %arg4: memref<128x128xf32, #tpu.memory_space<vmem>>, %arg5: memref<1x128xf32, #tpu.memory_space<vmem>>, %arg6: memref<128x128xf32, #tpu.memory_space<vmem>>, %arg7: memref<1x128xf32, #tpu.memory_space<vmem>>, %arg8: memref<1x128xf32, #tpu.memory_space<vmem>>, %arg9: memref<1x128xf32, #tpu.memory_space<vmem>>, %arg10: memref<8x128xf32, #tpu.memory_space<vmem>>) attributes {dimension_semantics = [#tpu.dimension_semantics<parallel>], iteration_bounds = array<i64: 2>, scalar_prefetch = 0 : i64, scratch_operands = 0 : i64, tpu.core_type = #tpu.core_type<tc>, window_params = [{transform_indices = @transform_0, window_bounds = array<i64: 8, 128>}, {pipeline_mode = #tpu.pipeline_mode<synchronous>, transform_indices = @transform_1, window_bounds = array<i64: 128, 128>}, {pipeline_mode = #tpu.pipeline_mode<synchronous>, transform_indices = @transform_2, window_bounds = array<i64: 1, 128>}, {pipeline_mode = #tpu.pipeline_mode<synchronous>, transform_indices = @transform_3, window_bounds = array<i64: 128, 128>}, {pipeline_mode = #tpu.pipeline_mode<synchronous>, transform_indices = @transform_4, window_bounds = array<i64: 1, 128>}, {pipeline_mode = #tpu.pipeline_mode<synchronous>, transform_indices = @transform_5, window_bounds = array<i64: 128, 128>}, {pipeline_mode = #tpu.pipeline_mode<synchronous>, transform_indices = @transform_6, window_bounds = array<i64: 1, 128>}, {pipeline_mode = #tpu.pipeline_mode<synchronous>, transform_indices = @transform_7, window_bounds = array<i64: 1, 128>}, {pipeline_mode = #tpu.pipeline_mode<synchronous>, transform_indices = @transform_8, window_bounds = array<i64: 1, 128>}, {transform_indices = @transform_9, window_bounds = array<i64: 8, 128>}]} {
    %c0 = arith.constant 0 : index
    %c0_0 = arith.constant 0 : index
    %0 = vector.load %arg1[%c0, %c0_0] : memref<8x128xf32, #tpu.memory_space<vmem>>, vector<8x128xf32>
    %c0_1 = arith.constant 0 : index
    %c0_2 = arith.constant 0 : index
    %1 = vector.load %arg2[%c0_1, %c0_2] : memref<128x128xf32, #tpu.memory_space<vmem>>, vector<128x128xf32>
    %cst = arith.constant dense<0.000000e+00> : vector<8x128xf32>
    %2 = tpu.matmul %0, %1, %cst {dimension_numbers = #tpu.dot_dimension_numbers<[1], [0], [0], [1], [0, 0, 1, 1], [], []>} : vector<8x128xf32>, vector<128x128xf32>, vector<8x128xf32> -> vector<8x128xf32>
    %c0_3 = arith.constant 0 : index
    %c0_4 = arith.constant 0 : index
    %3 = vector.load %arg3[%c0_3, %c0_4] : memref<1x128xf32, #tpu.memory_space<vmem>>, vector<1x128xf32>
    %4 = vector.broadcast %3 : vector<1x128xf32> to vector<8x128xf32>
    %5 = arith.addf %2, %4 : vector<8x128xf32>
    %cst_5 = arith.constant 5.000000e-01 : f32
    %6 = vector.broadcast %cst_5 : f32 to vector<8x128xf32>
    %7 = arith.mulf %6, %5 : vector<8x128xf32>
    %cst_6 = arith.constant 0.707106769 : f32
    %8 = vector.broadcast %cst_6 : f32 to vector<8x128xf32>
    %9 = arith.mulf %5, %8 : vector<8x128xf32>
    %10 = math.erf %9 : vector<8x128xf32>
    %cst_7 = arith.constant 1.000000e+00 : f32
    %11 = vector.broadcast %cst_7 : f32 to vector<8x128xf32>
    %12 = arith.addf %11, %10 : vector<8x128xf32>
    %13 = arith.mulf %7, %12 : vector<8x128xf32>
    %c0_8 = arith.constant 0 : index
    %c0_9 = arith.constant 0 : index
    %14 = vector.load %arg4[%c0_8, %c0_9] : memref<128x128xf32, #tpu.memory_space<vmem>>, vector<128x128xf32>
    %cst_10 = arith.constant dense<0.000000e+00> : vector<8x128xf32>
    %15 = tpu.matmul %13, %14, %cst_10 {dimension_numbers = #tpu.dot_dimension_numbers<[1], [0], [0], [1], [0, 0, 1, 1], [], []>} : vector<8x128xf32>, vector<128x128xf32>, vector<8x128xf32> -> vector<8x128xf32>
    %c0_11 = arith.constant 0 : index
    %c0_12 = arith.constant 0 : index
    %16 = vector.load %arg5[%c0_11, %c0_12] : memref<1x128xf32, #tpu.memory_space<vmem>>, vector<1x128xf32>
    %17 = vector.broadcast %16 : vector<1x128xf32> to vector<8x128xf32>
    %18 = arith.addf %15, %17 : vector<8x128xf32>
    %cst_13 = arith.constant 5.000000e-01 : f32
    %19 = vector.broadcast %cst_13 : f32 to vector<8x128xf32>
    %20 = arith.mulf %19, %18 : vector<8x128xf32>
    %cst_14 = arith.constant 0.707106769 : f32
    %21 = vector.broadcast %cst_14 : f32 to vector<8x128xf32>
    %22 = arith.mulf %18, %21 : vector<8x128xf32>
    %23 = math.erf %22 : vector<8x128xf32>
    %cst_15 = arith.constant 1.000000e+00 : f32
    %24 = vector.broadcast %cst_15 : f32 to vector<8x128xf32>
    %25 = arith.addf %24, %23 : vector<8x128xf32>
    %26 = arith.mulf %20, %25 : vector<8x128xf32>
    %c0_16 = arith.constant 0 : index
    %c0_17 = arith.constant 0 : index
    %27 = vector.load %arg6[%c0_16, %c0_17] : memref<128x128xf32, #tpu.memory_space<vmem>>, vector<128x128xf32>
    %cst_18 = arith.constant dense<0.000000e+00> : vector<8x128xf32>
    %28 = tpu.matmul %26, %27, %cst_18 {dimension_numbers = #tpu.dot_dimension_numbers<[1], [0], [0], [1], [0, 0, 1, 1], [], []>} : vector<8x128xf32>, vector<128x128xf32>, vector<8x128xf32> -> vector<8x128xf32>
    %c0_19 = arith.constant 0 : index
    %c0_20 = arith.constant 0 : index
    %29 = vector.load %arg7[%c0_19, %c0_20] : memref<1x128xf32, #tpu.memory_space<vmem>>, vector<1x128xf32>
    %30 = vector.broadcast %29 : vector<1x128xf32> to vector<8x128xf32>
    %31 = arith.addf %28, %30 : vector<8x128xf32>
    %32 = arith.addf %0, %31 : vector<8x128xf32>
    %cst_21 = arith.constant dense<0.000000e+00> : vector<8xf32>
    %33 = vector.multi_reduction <add>, %32, %cst_21 [1] : vector<8x128xf32> to vector<8xf32>
    %34 = vector.shape_cast %33 : vector<8xf32> to vector<8x1xf32>
    %cst_22 = arith.constant 3.125000e-02 : f32
    %35 = vector.broadcast %cst_22 : f32 to vector<8x1xf32>
    %36 = arith.mulf %34, %35 : vector<8x1xf32>
    %37 = vector.broadcast %36 : vector<8x1xf32> to vector<8x128xf32>
    %38 = arith.subf %32, %37 : vector<8x128xf32>
    %39 = tpu.iota {dimensions = array<i32: 1>} : vector<8x128xi32>
    %c32_i32 = arith.constant 32 : i32
    %40 = vector.broadcast %c32_i32 : i32 to vector<8x128xi32>
    %41 = arith.cmpi slt, %39, %40 : vector<8x128xi32>
    %cst_23 = arith.constant 0.000000e+00 : f32
    %42 = vector.broadcast %cst_23 : f32 to vector<8x128xf32>
    %43 = arith.select %41, %38, %42 : vector<8x128xi1>, vector<8x128xf32>
    %44 = arith.mulf %43, %43 : vector<8x128xf32>
    %cst_24 = arith.constant dense<0.000000e+00> : vector<8xf32>
    %45 = vector.multi_reduction <add>, %44, %cst_24 [1] : vector<8x128xf32> to vector<8xf32>
    %46 = vector.shape_cast %45 : vector<8xf32> to vector<8x1xf32>
    %cst_25 = arith.constant 3.125000e-02 : f32
    %47 = vector.broadcast %cst_25 : f32 to vector<8x1xf32>
    %48 = arith.mulf %46, %47 : vector<8x1xf32>
    %cst_26 = arith.constant 9.99999974E-6 : f32
    %49 = vector.broadcast %cst_26 : f32 to vector<8x1xf32>
    %50 = arith.addf %48, %49 : vector<8x1xf32>
    %51 = math.rsqrt %50 : vector<8x1xf32>
    %52 = vector.broadcast %51 : vector<8x1xf32> to vector<8x128xf32>
    %53 = arith.mulf %43, %52 : vector<8x128xf32>
    %c0_27 = arith.constant 0 : index
    %c0_28 = arith.constant 0 : index
    %54 = vector.load %arg8[%c0_27, %c0_28] : memref<1x128xf32, #tpu.memory_space<vmem>>, vector<1x128xf32>
    %55 = vector.broadcast %54 : vector<1x128xf32> to vector<8x128xf32>
    %56 = arith.mulf %53, %55 : vector<8x128xf32>
    %c0_29 = arith.constant 0 : index
    %c0_30 = arith.constant 0 : index
    %57 = vector.load %arg9[%c0_29, %c0_30] : memref<1x128xf32, #tpu.memory_space<vmem>>, vector<1x128xf32>
    %58 = vector.broadcast %57 : vector<1x128xf32> to vector<8x128xf32>
    %59 = arith.addf %56, %58 : vector<8x128xf32>
    %c0_31 = arith.constant 0 : index
    %c0_32 = arith.constant 0 : index
    %60 = vector.load %arg10[%c0_31, %c0_32] : memref<8x128xf32, #tpu.memory_space<vmem>>, vector<8x128xf32>
    tpu.vector_store %arg10[%c0_31, %c0_32], %59 {strides = array<i32>} : memref<8x128xf32, #tpu.memory_space<vmem>>, vector<8x128xf32>,
    return
  }
  func.func @transform_0(%arg0: i32) -> (i32, i32) {
    %c0_i32 = arith.constant 0 : i32
    %c0_i32_0 = arith.constant 0 : i32
    return %arg0, %c0_i32 : i32, i32
  }
  func.func @transform_1(%arg0: i32) -> (i32, i32) {
    %c0_i32 = arith.constant 0 : i32
    %c0_i32_0 = arith.constant 0 : i32
    %c0_i32_1 = arith.constant 0 : i32
    return %c0_i32, %c0_i32_0 : i32, i32
  }
  func.func @transform_2(%arg0: i32) -> (i32, i32) {
    %c0_i32 = arith.constant 0 : i32
    %c0_i32_0 = arith.constant 0 : i32
    %c0_i32_1 = arith.constant 0 : i32
    return %c0_i32, %c0_i32_0 : i32, i32
  }
  func.func @transform_3(%arg0: i32) -> (i32, i32) {
    %c0_i32 = arith.constant 0 : i32
    %c0_i32_0 = arith.constant 0 : i32
    %c0_i32_1 = arith.constant 0 : i32
    return %c0_i32, %c0_i32_0 : i32, i32
  }
  func.func @transform_4(%arg0: i32) -> (i32, i32) {
    %c0_i32 = arith.constant 0 : i32
    %c0_i32_0 = arith.constant 0 : i32
    %c0_i32_1 = arith.constant 0 : i32
    return %c0_i32, %c0_i32_0 : i32, i32
  }
  func.func @transform_5(%arg0: i32) -> (i32, i32) {
    %c0_i32 = arith.constant 0 : i32
    %c0_i32_0 = arith.constant 0 : i32
    %c0_i32_1 = arith.constant 0 : i32
    return %c0_i32, %c0_i32_0 : i32, i32
  }
  func.func @transform_6(%arg0: i32) -> (i32, i32) {
    %c0_i32 = arith.constant 0 : i32
    %c0_i32_0 = arith.constant 0 : i32
    %c0_i32_1 = arith.constant 0 : i32
    return %c0_i32, %c0_i32_0 : i32, i32
  }
  func.func @transform_7(%arg0: i32) -> (i32, i32) {
    %c0_i32 = arith.constant 0 : i32
    %c0_i32_0 = arith.constant 0 : i32
    %c0_i32_1 = arith.constant 0 : i32
    return %c0_i32, %c0_i32_0 : i32, i32
  }
  func.func @transform_8(%arg0: i32) -> (i32, i32) {
    %c0_i32 = arith.constant 0 : i32
    %c0_i32_0 = arith.constant 0 : i32
    %c0_i32_1 = arith.constant 0 : i32
    return %c0_i32, %c0_i32_0 : i32, i32
  }
  func.func @transform_9(%arg0: i32) -> (i32, i32) {
    %c0_i32 = arith.constant 0 : i32
    %c0_i32_0 = arith.constant 0 : i32
    return %arg0, %c0_i32 : i32, i32
  }
}

module attributes {stable_mosaic.version = 11 : i64} {
  func.func @mlp_adapter_kernel(%arg0: i32, %arg1: memref<8x128xf32, #tpu.memory_space<vmem>>, %arg2: memref<128x128xf32, #tpu.memory_space<vmem>>, %arg3: memref<1x128xf32, #tpu.memory_space<vmem>>, %arg4: memref<128x128xf32, #tpu.memory_space<vmem>>, %arg5: memref<1x128xf32, #tpu.memory_space<vmem>>, %arg6: memref<128x128xf32, #tpu.memory_space<vmem>>, %arg7: memref<1x128xf32, #tpu.memory_space<vmem>>, %arg8: memref<1x128xf32, #tpu.memory_space<vmem>>, %arg9: memref<1x128xf32, #tpu.memory_space<vmem>>, %arg10: memref<8x128xf32, #tpu.memory_space<vmem>>) attributes {dimension_semantics = [#tpu.dimension_semantics<parallel>], iteration_bounds = array<i64: 2>, scalar_prefetch = 0 : i64, scratch_operands = 0 : i64, tpu.core_type = #tpu.core_type<tc>, window_params = [{transform_indices = @transform_0, window_bounds = array<i64: 8, 128>}, {pipeline_mode = #tpu.pipeline_mode<synchronous>, transform_indices = @transform_1, window_bounds = array<i64: 128, 128>}, {pipeline_mode = #tpu.pipeline_mode<synchronous>, transform_indices = @transform_2, window_bounds = array<i64: 1, 128>}, {pipeline_mode = #tpu.pipeline_mode<synchronous>, transform_indices = @transform_3, window_bounds = array<i64: 128, 128>}, {pipeline_mode = #tpu.pipeline_mode<synchronous>, transform_indices = @transform_4, window_bounds = array<i64: 1, 128>}, {pipeline_mode = #tpu.pipeline_mode<synchronous>, transform_indices = @transform_5, window_bounds = array<i64: 128, 128>}, {pipeline_mode = #tpu.pipeline_mode<synchronous>, transform_indices = @transform_6, window_bounds = array<i64: 1, 128>}, {pipeline_mode = #tpu.pipeline_mode<synchronous>, transform_indices = @transform_7, window_bounds = array<i64: 1, 128>}, {pipeline_mode = #tpu.pipeline_mode<synchronous>, transform_indices = @transform_8, window_bounds = array<i64: 1, 128>}, {transform_indices = @transform_9, window_bounds = array<i64: 8, 128>}]} {
    %c0 = arith.constant 0 : index
    %c0_0 = arith.constant 0 : index
    %0 = vector.load %arg1[%c0, %c0_0] : memref<8x128xf32, #tpu.memory_space<vmem>>, vector<8x128xf32>
    %c0_1 = arith.constant 0 : index
    %c0_2 = arith.constant 0 : index
    %1 = vector.load %arg2[%c0_1, %c0_2] : memref<128x128xf32, #tpu.memory_space<vmem>>, vector<128x128xf32>
    %cst = arith.constant dense<0.000000e+00> : vector<8x128xf32>
    %2 = tpu.matmul %0, %1, %cst {dimension_numbers = #tpu.dot_dimension_numbers<[1], [0], [0], [1], [0, 0, 1, 1], [], []>} : vector<8x128xf32>, vector<128x128xf32>, vector<8x128xf32> -> vector<8x128xf32>
    %c0_3 = arith.constant 0 : index
    %c0_4 = arith.constant 0 : index
    %3 = vector.load %arg3[%c0_3, %c0_4] : memref<1x128xf32, #tpu.memory_space<vmem>>, vector<1x128xf32>
    %4 = vector.broadcast %3 : vector<1x128xf32> to vector<8x128xf32>
    %5 = arith.addf %2, %4 : vector<8x128xf32>
    %cst_5 = arith.constant 5.000000e-01 : f32
    %6 = vector.broadcast %cst_5 : f32 to vector<8x128xf32>
    %7 = arith.mulf %6, %5 : vector<8x128xf32>
    %cst_6 = arith.constant 0.707106769 : f32
    %8 = vector.broadcast %cst_6 : f32 to vector<8x128xf32>
    %9 = arith.mulf %5, %8 : vector<8x128xf32>
    %10 = math.erf %9 : vector<8x128xf32>
    %cst_7 = arith.constant 1.000000e+00 : f32
    %11 = vector.broadcast %cst_7 : f32 to vector<8x128xf32>
    %12 = arith.addf %11, %10 : vector<8x128xf32>
    %13 = arith.mulf %7, %12 : vector<8x128xf32>
    %c0_8 = arith.constant 0 : index
    %c0_9 = arith.constant 0 : index
    %14 = vector.load %arg4[%c0_8, %c0_9] : memref<128x128xf32, #tpu.memory_space<vmem>>, vector<128x128xf32>
    %cst_10 = arith.constant dense<0.000000e+00> : vector<8x128xf32>
    %15 = tpu.matmul %13, %14, %cst_10 {dimension_numbers = #tpu.dot_dimension_numbers<[1], [0], [0], [1], [0, 0, 1, 1], [], []>} : vector<8x128xf32>, vector<128x128xf32>, vector<8x128xf32> -> vector<8x128xf32>
    %c0_11 = arith.constant 0 : index
    %c0_12 = arith.constant 0 : index
    %16 = vector.load %arg5[%c0_11, %c0_12] : memref<1x128xf32, #tpu.memory_space<vmem>>, vector<1x128xf32>
    %17 = vector.broadcast %16 : vector<1x128xf32> to vector<8x128xf32>
    %18 = arith.addf %15, %17 : vector<8x128xf32>
    %cst_13 = arith.constant 5.000000e-01 : f32
    %19 = vector.broadcast %cst_13 : f32 to vector<8x128xf32>
    %20 = arith.mulf %19, %18 : vector<8x128xf32>
    %cst_14 = arith.constant 0.707106769 : f32
    %21 = vector.broadcast %cst_14 : f32 to vector<8x128xf32>
    %22 = arith.mulf %18, %21 : vector<8x128xf32>
    %23 = math.erf %22 : vector<8x128xf32>
    %cst_15 = arith.constant 1.000000e+00 : f32
    %24 = vector.broadcast %cst_15 : f32 to vector<8x128xf32>
    %25 = arith.addf %24, %23 : vector<8x128xf32>
    %26 = arith.mulf %20, %25 : vector<8x128xf32>
    %c0_16 = arith.constant 0 : index
    %c0_17 = arith.constant 0 : index
    %27 = vector.load %arg6[%c0_16, %c0_17] : memref<128x128xf32, #tpu.memory_space<vmem>>, vector<128x128xf32>
    %cst_18 = arith.constant dense<0.000000e+00> : vector<8x128xf32>
    %28 = tpu.matmul %26, %27, %cst_18 {dimension_numbers = #tpu.dot_dimension_numbers<[1], [0], [0], [1], [0, 0, 1, 1], [], []>} : vector<8x128xf32>, vector<128x128xf32>, vector<8x128xf32> -> vector<8x128xf32>
    %c0_19 = arith.constant 0 : index
    %c0_20 = arith.constant 0 : index
    %29 = vector.load %arg7[%c0_19, %c0_20] : memref<1x128xf32, #tpu.memory_space<vmem>>, vector<1x128xf32>
    %30 = vector.broadcast %29 : vector<1x128xf32> to vector<8x128xf32>
    %31 = arith.addf %28, %30 : vector<8x128xf32>
    %32 = arith.addf %0, %31 : vector<8x128xf32>
    %cst_21 = arith.constant dense<0.000000e+00> : vector<8xf32>
    %33 = vector.multi_reduction <add>, %32, %cst_21 [1] : vector<8x128xf32> to vector<8xf32>
    %34 = vector.shape_cast %33 : vector<8xf32> to vector<8x1xf32>
    %cst_22 = arith.constant 3.125000e-02 : f32
    %35 = vector.broadcast %cst_22 : f32 to vector<8x1xf32>
    %36 = arith.mulf %34, %35 : vector<8x1xf32>
    %37 = vector.broadcast %36 : vector<8x1xf32> to vector<8x128xf32>
    %38 = arith.subf %32, %37 : vector<8x128xf32>
    %39 = tpu.iota {dimensions = array<i32: 1>} : vector<8x128xi32>
    %c32_i32 = arith.constant 32 : i32
    %40 = vector.broadcast %c32_i32 : i32 to vector<8x128xi32>
    %41 = arith.cmpi slt, %39, %40 : vector<8x128xi32>
    %cst_23 = arith.constant 0.000000e+00 : f32
    %42 = vector.broadcast %cst_23 : f32 to vector<8x128xf32>
    %43 = arith.select %41, %38, %42 : vector<8x128xi1>, vector<8x128xf32>
    %44 = arith.mulf %43, %43 : vector<8x128xf32>
    %cst_24 = arith.constant dense<0.000000e+00> : vector<8xf32>
    %45 = vector.multi_reduction <add>, %44, %cst_24 [1] : vector<8x128xf32> to vector<8xf32>
    %46 = vector.shape_cast %45 : vector<8xf32> to vector<8x1xf32>
    %cst_25 = arith.constant 3.125000e-02 : f32
    %47 = vector.broadcast %cst_25 : f32 to vector<8x1xf32>
    %48 = arith.mulf %46, %47 : vector<8x1xf32>
    %cst_26 = arith.constant 9.99999974E-6 : f32
    %49 = vector.broadcast %cst_26 : f32 to vector<8x1xf32>
    %50 = arith.addf %48, %49 : vector<8x1xf32>
    %51 = math.rsqrt %50 : vector<8x1xf32>
    %52 = vector.broadcast %51 : vector<8x1xf32> to vector<8x128xf32>
    %53 = arith.mulf %43, %52 : vector<8x128xf32>
    %c0_27 = arith.constant 0 : index
    %c0_28 = arith.constant 0 : index
    %54 = vector.load %arg8[%c0_27, %c0_28] : memref<1x128xf32, #tpu.memory_space<vmem>>, vector<1x128xf32>
    %55 = vector.broadcast %54 : vector<1x128xf32> to vector<8x128xf32>
    %56 = arith.mulf %53, %55 : vector<8x128xf32>
    %c0_29 = arith.constant 0 : index
    %c0_30 = arith.constant 0 : index
    %57 = vector.load %arg9[%c0_29, %c0_30] : memref<1x128xf32, #tpu.memory_space<vmem>>, vector<1x128xf32>
    %58 = vector.broadcast %57 : vector<1x128xf32> to vector<8x128xf32>
    %59 = arith.addf %56, %58 : vector<8x128xf32>
    %c0_31 = arith.constant 0 : index
    %c0_32 = arith.constant 0 : index
    %60 = vector.load %arg10[%c0_31, %c0_32] : memref<8x128xf32, #tpu.memory_space<vmem>>, vector<8x128xf32>
    tpu.vector_store %arg10[%c0_31, %c0_32], %59 {strides = array<i32>} : memref<8x128xf32, #tpu.memory_space<vmem>>, vector<8x128xf32>,
    return
  }
  func.func @transform_0(%arg0: i32) -> (i32, i32) {
    %c0_i32 = arith.constant 0 : i32
    %c0_i32_0 = arith.constant 0 : i32
    return %arg0, %c0_i32 : i32, i32
  }
  func.func @transform_1(%arg0: i32) -> (i32, i32) {
    %c0_i32 = arith.constant 0 : i32
    %c0_i32_0 = arith.constant 0 : i32
    %c0_i32_1 = arith.constant 0 : i32
    return %c0_i32, %c0_i32_0 : i32, i32
  }
  func.func @transform_2(%arg0: i32) -> (i32, i32) {
    %c0_i32 = arith.constant 0 : i32
    %c0_i32_0 = arith.constant 0 : i32
    %c0_i32_1 = arith.constant 0 : i32
    return %c0_i32, %c0_i32_0 : i32, i32
  }
  func.func @transform_3(%arg0: i32) -> (i32, i32) {
    %c0_i32 = arith.constant 0 : i32
    %c0_i32_0 = arith.constant 0 : i32
    %c0_i32_1 = arith.constant 0 : i32
    return %c0_i32, %c0_i32_0 : i32, i32
  }
  func.func @transform_4(%arg0: i32) -> (i32, i32) {
    %c0_i32 = arith.constant 0 : i32
    %c0_i32_0 = arith.constant 0 : i32
    %c0_i32_1 = arith.constant 0 : i32
    return %c0_i32, %c0_i32_0 : i32, i32
  }
  func.func @transform_5(%arg0: i32) -> (i32, i32) {
    %c0_i32 = arith.constant 0 : i32
    %c0_i32_0 = arith.constant 0 : i32
    %c0_i32_1 = arith.constant 0 : i32
    return %c0_i32, %c0_i32_0 : i32, i32
  }
  func.func @transform_6(%arg0: i32) -> (i32, i32) {
    %c0_i32 = arith.constant 0 : i32
    %c0_i32_0 = arith.constant 0 : i32
    %c0_i32_1 = arith.constant 0 : i32
    return %c0_i32, %c0_i32_0 : i32, i32
  }
  func.func @transform_7(%arg0: i32) -> (i32, i32) {
    %c0_i32 = arith.constant 0 : i32
    %c0_i32_0 = arith.constant 0 : i32
    %c0_i32_1 = arith.constant 0 : i32
    return %c0_i32, %c0_i32_0 : i32, i32
  }
  func.func @transform_8(%arg0: i32) -> (i32, i32) {
    %c0_i32 = arith.constant 0 : i32
    %c0_i32_0 = arith.constant 0 : i32
    %c0_i32_1 = arith.constant 0 : i32
    return %c0_i32, %c0_i32_0 : i32, i32
  }
  func.func @transform_9(%arg0: i32) -> (i32, i32) {
    %c0_i32 = arith.constant 0 : i32
    %c0_i32_0 = arith.constant 0 : i32
    return %arg0, %c0_i32 : i32, i32
  }
}

</mosaic_0001>

<llo_original>
// kernel: mlp_adapter_forward.1
$region0: #{mlp_adapter_forward.1}
  #allocation0 [shape = 'u32[]', space=smem, size = 0x4, offset = 0x4, fixed_abs, tag = 'smem constant byte address 0x4 - core index']
  #allocation1 [shape = 'u32[144,128]{1,0:T(1,128)}', space=vmem, size = 0x12000, scoped, tag = 'internal scratch']
  %s0 = inlined_call_operand.vmem [shape: f32[16,128], index: 0, kind: input, shape index: {}]
  %s1 = inlined_call_operand.vmem [shape: f32[128,128], index: 1, kind: input, shape index: {}]
  %s2 = inlined_call_operand.vmem [shape: f32[1,128], index: 2, kind: input, shape index: {}]
  %s3 = inlined_call_operand.vmem [shape: f32[128,128], index: 3, kind: input, shape index: {}]
  %s4 = inlined_call_operand.vmem [shape: f32[1,128], index: 4, kind: input, shape index: {}]
  %s5 = inlined_call_operand.vmem [shape: f32[128,128], index: 5, kind: input, shape index: {}]
  %s6 = inlined_call_operand.vmem [shape: f32[1,128], index: 6, kind: input, shape index: {}]
  %s7 = inlined_call_operand.vmem [shape: f32[1,128], index: 7, kind: input, shape index: {}]
  %s8 = inlined_call_operand.vmem [shape: f32[1,128], index: 8, kind: input, shape index: {}]
  %s9 = inlined_call_operand.vmem [shape: f32[16,128], index: 9, kind: output, shape index: {}]
  %s10 = sld [smem:[#allocation0]]
  $region69: #{mlp_adapter_forward.1} parent=0
    _
  %s12 = ssub.s32 1, %s10
  %s13 = scalar_select 0, %s12, %s10
  loop: start=0, step=1, limit=4
  $region2: #{mlp_adapter_forward.1} parent=0 // loop_pre_header
    _
  $region3: #{mlp_adapter_forward.1} parent=0 // loop_header
    %s15 = sphi 0, %s19
    %p16 = scmp.ge.s32.totalorder %s15, 4
    %s25 = sphi 0, %s27
    %s28 = sphi 0, %s25
    %s29 = sphi 0, %s28
    %s45 = sphi 0, %s29
    %s49 = sphi 0, %s49
    %s51 = sphi 0, %s49
    %s52 = sphi 0, %s51
    %s66 = sphi 0, %s52
    %s70 = sphi 0, %s70
    %s72 = sphi 0, %s70
    %s73 = sphi 0, %s72
    %s87 = sphi 0, %s73
    %s91 = sphi 0, %s91
    %s93 = sphi 0, %s91
    %s94 = sphi 0, %s93
    %s108 = sphi 0, %s94
    %s112 = sphi 0, %s112
    %s114 = sphi 0, %s112
    %s115 = sphi 0, %s114
    %s129 = sphi 0, %s115
    %s133 = sphi 0, %s133
    %s135 = sphi 0, %s133
    %s136 = sphi 0, %s135
    %s150 = sphi 0, %s136
    %s154 = sphi 0, %s154
    %s156 = sphi 0, %s154
    %s157 = sphi 0, %s156
    %s171 = sphi 0, %s157
    %s175 = sphi 0, %s175
    %s177 = sphi 0, %s175
    %s178 = sphi 0, %s177
    %s192 = sphi 0, %s178
    %s196 = sphi 0, %s196
    %s198 = sphi 0, %s196
    %s199 = sphi 0, %s198
    %s213 = sphi 0, %s199
    %s219 = sphi 0, %s221
    %s222 = sphi 0, %s219
    %s223 = sphi 0, %s222
    %s239 = sphi 0, %s223
  $region4: #{mlp_adapter_forward.1} parent=0 // loop_header_branch
    %18 = sbr.rel (%p16) target = $region8
  $region5: #{mlp_adapter_forward.1} parent=0 // loop_body
    %s20 = ssub.s32 %s15, 1
    %s21 = ssub.s32 %s15, 2
    %s22 = sadd.s32 %s15, 1
    %s23 = ssub.s32 %s15, %s22
    %p24 = scmp.eq.s32.totalorder %s23, 0
    %s26 = sadd.s32 %s25, 1
    %s27 = scalar_select %p24, %s25, %s26
    %p30 = pneg %p24
    %p31 = scmp.eq.s32.totalorder %s15, 1
    %p32 = por %p30, %p31
    %p33 = scmp.ne.s32.totalorder %s25, %s28
    %p34 = scmp.eq.s32.totalorder %s15, 0
    %p35 = por %p33, %p34
    %p36 = scmp.ne.s32.totalorder %s25, %s28
    %p37 = scmp.eq.s32.totalorder %s20, 1
    %p38 = por %p36, %p37
    %p39 = scmp.ne.s32.totalorder %s28, %s29
    %p40 = scmp.eq.s32.totalorder %s20, 0
    %p41 = por %p39, %p40
    %p42 = scmp.ne.s32.totalorder %s28, %s29
    %p43 = scmp.eq.s32.totalorder %s21, 1
    %p44 = por %p42, %p43
    %p46 = scmp.ne.s32.totalorder %s29, %s45
    %p47 = scmp.eq.s32.totalorder %s21, 0
    %p48 = por %p46, %p47
    %s50 = sadd.s32 %s49, 1
    %p53 = scmp.eq.s32.totalorder %s15, 1
    %p54 = scmp.ne.s32.totalorder %s49, %s51
    %p55 = scmp.eq.s32.totalorder %s15, 0
    %p56 = por %p54, %p55
    %p57 = scmp.ne.s32.totalorder %s49, %s51
    %p58 = scmp.eq.s32.totalorder %s20, 1
    %p59 = por %p57, %p58
    %p60 = scmp.ne.s32.totalorder %s51, %s52
    %p61 = scmp.eq.s32.totalorder %s20, 0
    %p62 = por %p60, %p61
    %p63 = scmp.ne.s32.totalorder %s51, %s52
    %p64 = scmp.eq.s32.totalorder %s21, 1
    %p65 = por %p63, %p64
    %p67 = scmp.ne.s32.totalorder %s52, %s66
    %p68 = scmp.eq.s32.totalorder %s21, 0
    %p69 = por %p67, %p68
    %s71 = sadd.s32 %s70, 1
    %p74 = scmp.eq.s32.totalorder %s15, 1
    %p75 = scmp.ne.s32.totalorder %s70, %s72
    %p76 = scmp.eq.s32.totalorder %s15, 0
    %p77 = por %p75, %p76
    %p78 = scmp.ne.s32.totalorder %s70, %s72
    %p79 = scmp.eq.s32.totalorder %s20, 1
    %p80 = por %p78, %p79
    %p81 = scmp.ne.s32.totalorder %s72, %s73
    %p82 = scmp.eq.s32.totalorder %s20, 0
    %p83 = por %p81, %p82
    %p84 = scmp.ne.s32.totalorder %s72, %s73
    %p85 = scmp.eq.s32.totalorder %s21, 1
    %p86 = por %p84, %p85
    %p88 = scmp.ne.s32.totalorder %s73, %s87
    %p89 = scmp.eq.s32.totalorder %s21, 0
    %p90 = por %p88, %p89
    %s92 = sadd.s32 %s91, 1
    %p95 = scmp.eq.s32.totalorder %s15, 1
    %p96 = scmp.ne.s32.totalorder %s91, %s93
    %p97 = scmp.eq.s32.totalorder %s15, 0
    %p98 = por %p96, %p97
    %p99 = scmp.ne.s32.totalorder %s91, %s93
    %p100 = scmp.eq.s32.totalorder %s20, 1
    %p101 = por %p99, %p100
    %p102 = scmp.ne.s32.totalorder %s93, %s94
    %p103 = scmp.eq.s32.totalorder %s20, 0
    %p104 = por %p102, %p103
    %p105 = scmp.ne.s32.totalorder %s93, %s94
    %p106 = scmp.eq.s32.totalorder %s21, 1
    %p107 = por %p105, %p106
    %p109 = scmp.ne.s32.totalorder %s94, %s108
    %p110 = scmp.eq.s32.totalorder %s21, 0
    %p111 = por %p109, %p110
    %s113 = sadd.s32 %s112, 1
    %p116 = scmp.eq.s32.totalorder %s15, 1
    %p117 = scmp.ne.s32.totalorder %s112, %s114
    %p118 = scmp.eq.s32.totalorder %s15, 0
    %p119 = por %p117, %p118
    %p120 = scmp.ne.s32.totalorder %s112, %s114
    %p121 = scmp.eq.s32.totalorder %s20, 1
    %p122 = por %p120, %p121
    %p123 = scmp.ne.s32.totalorder %s114, %s115
    %p124 = scmp.eq.s32.totalorder %s20, 0
    %p125 = por %p123, %p124
    %p126 = scmp.ne.s32.totalorder %s114, %s115
    %p127 = scmp.eq.s32.totalorder %s21, 1
    %p128 = por %p126, %p127
    %p130 = scmp.ne.s32.totalorder %s115, %s129
    %p131 = scmp.eq.s32.totalorder %s21, 0
    %p132 = por %p130, %p131
    %s134 = sadd.s32 %s133, 1
    %p137 = scmp.eq.s32.totalorder %s15, 1
    %p138 = scmp.ne.s32.totalorder %s133, %s135
    %p139 = scmp.eq.s32.totalorder %s15, 0
    %p140 = por %p138, %p139
    %p141 = scmp.ne.s32.totalorder %s133, %s135
    %p142 = scmp.eq.s32.totalorder %s20, 1
    %p143 = por %p141, %p142
    %p144 = scmp.ne.s32.totalorder %s135, %s136
    %p145 = scmp.eq.s32.totalorder %s20, 0
    %p146 = por %p144, %p145
    %p147 = scmp.ne.s32.totalorder %s135, %s136
    %p148 = scmp.eq.s32.totalorder %s21, 1
    %p149 = por %p147, %p148
    %p151 = scmp.ne.s32.totalorder %s136, %s150
    %p152 = scmp.eq.s32.totalorder %s21, 0
    %p153 = por %p151, %p152
    %s155 = sadd.s32 %s154, 1
    %p158 = scmp.eq.s32.totalorder %s15, 1
    %p159 = scmp.ne.s32.totalorder %s154, %s156
    %p160 = scmp.eq.s32.totalorder %s15, 0
    %p161 = por %p159, %p160
    %p162 = scmp.ne.s32.totalorder %s154, %s156
    %p163 = scmp.eq.s32.totalorder %s20, 1
    %p164 = por %p162, %p163
    %p165 = scmp.ne.s32.totalorder %s156, %s157
    %p166 = scmp.eq.s32.totalorder %s20, 0
    %p167 = por %p165, %p166
    %p168 = scmp.ne.s32.totalorder %s156, %s157
    %p169 = scmp.eq.s32.totalorder %s21, 1
    %p170 = por %p168, %p169
    %p172 = scmp.ne.s32.totalorder %s157, %s171
    %p173 = scmp.eq.s32.totalorder %s21, 0
    %p174 = por %p172, %p173
    %s176 = sadd.s32 %s175, 1
    %p179 = scmp.eq.s32.totalorder %s15, 1
    %p180 = scmp.ne.s32.totalorder %s175, %s177
    %p181 = scmp.eq.s32.totalorder %s15, 0
    %p182 = por %p180, %p181
    %p183 = scmp.ne.s32.totalorder %s175, %s177
    %p184 = scmp.eq.s32.totalorder %s20, 1
    %p185 = por %p183, %p184
    %p186 = scmp.ne.s32.totalorder %s177, %s178
    %p187 = scmp.eq.s32.totalorder %s20, 0
    %p188 = por %p186, %p187
    %p189 = scmp.ne.s32.totalorder %s177, %s178
    %p190 = scmp.eq.s32.totalorder %s21, 1
    %p191 = por %p189, %p190
    %p193 = scmp.ne.s32.totalorder %s178, %s192
    %p194 = scmp.eq.s32.totalorder %s21, 0
    %p195 = por %p193, %p194
    %s197 = sadd.s32 %s196, 1
    %p200 = scmp.eq.s32.totalorder %s15, 1
    %p201 = scmp.ne.s32.totalorder %s196, %s198
    %p202 = scmp.eq.s32.totalorder %s15, 0
    %p203 = por %p201, %p202
    %p204 = scmp.ne.s32.totalorder %s196, %s198
    %p205 = scmp.eq.s32.totalorder %s20, 1
    %p206 = por %p204, %p205
    %p207 = scmp.ne.s32.totalorder %s198, %s199
    %p208 = scmp.eq.s32.totalorder %s20, 0
    %p209 = por %p207, %p208
    %p210 = scmp.ne.s32.totalorder %s198, %s199
    %p211 = scmp.eq.s32.totalorder %s21, 1
    %p212 = por %p210, %p211
    %p214 = scmp.ne.s32.totalorder %s199, %s213
    %p215 = scmp.eq.s32.totalorder %s21, 0
    %p216 = por %p214, %p215
    %s217 = ssub.s32 %s15, %s22
    %p218 = scmp.eq.s32.totalorder %s217, 0
    %s220 = sadd.s32 %s219, 1
    %s221 = scalar_select %p218, %s219, %s220
    %p224 = pneg %p218
    %p225 = scmp.eq.s32.totalorder %s15, 1
    %p226 = por %p224, %p225
    %p227 = scmp.ne.s32.totalorder %s219, %s222
    %p228 = scmp.eq.s32.totalorder %s15, 0
    %p229 = por %p227, %p228
    %p230 = scmp.ne.s32.totalorder %s219, %s222
    %p231 = scmp.eq.s32.totalorder %s20, 1
    %p232 = por %p230, %p231
    %p233 = scmp.ne.s32.totalorder %s222, %s223
    %p234 = scmp.eq.s32.totalorder %s20, 0
    %p235 = por %p233, %p234
    %p236 = scmp.ne.s32.totalorder %s222, %s223
    %p237 = scmp.eq.s32.totalorder %s21, 1
    %p238 = por %p236, %p237
    %p240 = scmp.ne.s32.totalorder %s223, %s239
    %p241 = scmp.eq.s32.totalorder %s21, 0
    %p242 = por %p240, %p241
    %p243 = scmp.le.s32.totalorder 1, %s15
    %p244 = scmp.lt.s32.totalorder %s15, 3
    %p245 = pnand %p243, %p244
    %p246 = pneg %p245
    // Predicated region
    $region9: #{mlp_adapter_forward.1} parent=5 // pred_check
      _
    $region10: #{mlp_adapter_forward.1} parent=5 // pred_check_branch
      %248 = sbr.rel (%p245) target = $region12
    $region11: #{mlp_adapter_forward.1} parent=5 // pred_region
      %s249 = ssub.s32 %s15, 1
      // Predicated region
      $region13: #{mlp_adapter_forward.1} parent=11 // pred_check
        %p250 = pneg %p62
      $region14: #{mlp_adapter_forward.1} parent=11 // pred_check_branch
        %252 = sbr.rel (%p250) target = $region16
      $region15: #{mlp_adapter_forward.1} parent=11 // pred_region
        _
      $region16: #{mlp_adapter_forward.1} parent=11 // pred_fallthru
        _
      // Predicated region
      $region17: #{mlp_adapter_forward.1} parent=11 // pred_check
        %p253 = pneg %p83
      $region18: #{mlp_adapter_forward.1} parent=11 // pred_check_branch
        %255 = sbr.rel (%p253) target = $region20
      $region19: #{mlp_adapter_forward.1} parent=11 // pred_region
        _
      $region20: #{mlp_adapter_forward.1} parent=11 // pred_fallthru
        _
      // Predicated region
      $region21: #{mlp_adapter_forward.1} parent=11 // pred_check
        %p256 = pneg %p104
      $region22: #{mlp_adapter_forward.1} parent=11 // pred_check_branch
        %258 = sbr.rel (%p256) target = $region24
      $region23: #{mlp_adapter_forward.1} parent=11 // pred_region
        _
      $region24: #{mlp_adapter_forward.1} parent=11 // pred_fallthru
        _
      // Predicated region
      $region25: #{mlp_adapter_forward.1} parent=11 // pred_check
        %p259 = pneg %p125
      $region26: #{mlp_adapter_forward.1} parent=11 // pred_check_branch
        %261 = sbr.rel (%p259) target = $region28
      $region27: #{mlp_adapter_forward.1} parent=11 // pred_region
        _
      $region28: #{mlp_adapter_forward.1} parent=11 // pred_fallthru
        _
      // Predicated region
      $region29: #{mlp_adapter_forward.1} parent=11 // pred_check
        %p262 = pneg %p146
      $region30: #{mlp_adapter_forward.1} parent=11 // pred_check_branch
        %264 = sbr.rel (%p262) target = $region32
      $region31: #{mlp_adapter_forward.1} parent=11 // pred_region
        _
      $region32: #{mlp_adapter_forward.1} parent=11 // pred_fallthru
        _
      // Predicated region
      $region33: #{mlp_adapter_forward.1} parent=11 // pred_check
        %p265 = pneg %p167
      $region34: #{mlp_adapter_forward.1} parent=11 // pred_check_branch
        %267 = sbr.rel (%p265) target = $region36
      $region35: #{mlp_adapter_forward.1} parent=11 // pred_region
        _
      $region36: #{mlp_adapter_forward.1} parent=11 // pred_fallthru
        _
      // Predicated region
      $region37: #{mlp_adapter_forward.1} parent=11 // pred_check
        %p268 = pneg %p188
      $region38: #{mlp_adapter_forward.1} parent=11 // pred_check_branch
        %270 = sbr.rel (%p268) target = $region40
      $region39: #{mlp_adapter_forward.1} parent=11 // pred_region
        _
      $region40: #{mlp_adapter_forward.1} parent=11 // pred_fallthru
        _
      // Predicated region
      $region41: #{mlp_adapter_forward.1} parent=11 // pred_check
        %p271 = pneg %p209
      $region42: #{mlp_adapter_forward.1} parent=11 // pred_check_branch
        %273 = sbr.rel (%p271) target = $region44
      $region43: #{mlp_adapter_forward.1} parent=11 // pred_region
        _
      $region44: #{mlp_adapter_forward.1} parent=11 // pred_fallthru
        _
    $region12: #{mlp_adapter_forward.1} parent=5 // pred_fallthru
      _
    %p274 = scmp.lt.s32.totalorder %s15, 2
    // Predicated region
    $region45: #{mlp_adapter_forward.1} parent=5 // pred_check
      %p275 = pneg %p274
    $region46: #{mlp_adapter_forward.1} parent=5 // pred_check_branch
      %277 = sbr.rel (%p275) target = $region48
    $region47: #{mlp_adapter_forward.1} parent=5 // pred_region
      // Predicated region
      $region49: #{mlp_adapter_forward.1} parent=47 // pred_check
        %p278 = pneg %p35
      $region50: #{mlp_adapter_forward.1} parent=47 // pred_check_branch
        %280 = sbr.rel (%p278) target = $region52
      $region51: #{mlp_adapter_forward.1} parent=47 // pred_region
        %p281 = scmp.lt.s32.totalorder %s15, 1
        %s282 = scalar_select %p281, %s15, 1
        %s283 = smul.addr %s282, 8
        %s284 = scalar_lea.vmem %s0, %s283
      $region52: #{mlp_adapter_forward.1} parent=47 // pred_fallthru
        _
    $region48: #{mlp_adapter_forward.1} parent=5 // pred_fallthru
      _
    %p285 = scmp.le.s32.totalorder 1, %s15
    %p286 = scmp.lt.s32.totalorder %s15, 3
    %p287 = pnand %p285, %p286
    %p288 = pneg %p287
    // Predicated region
    $region53: #{mlp_adapter_forward.1} parent=5 // pred_check
      _
    $region54: #{mlp_adapter_forward.1} parent=5 // pred_check_branch
      %290 = sbr.rel (%p287) target = $region56
    $region55: #{mlp_adapter_forward.1} parent=5 // pred_region
      %s291 = ssub.s32 %s15, 1
      %p292 = scmp.lt.s32.totalorder %s20, 1
      %s293 = scalar_select %p292, %s20, 1
      %s294 = smul.addr %s293, 8
      %s295 = scalar_lea.vmem %s0, %s294
      %p296 = pneg %p41
      %p297 = pneg %p38
      %p298 = pneg %p62
      %p299 = pneg %p59
      %p300 = pneg %p83
      %p301 = pneg %p80
      %p302 = pneg %p104
      %p303 = pneg %p101
      %p304 = pneg %p125
      %p305 = pneg %p122
      %p306 = pneg %p146
      %p307 = pneg %p143
      %p308 = pneg %p167
      %p309 = pneg %p164
      %p310 = pneg %p188
      %p311 = pneg %p185
      %p312 = pneg %p209
      %p313 = pneg %p206
      %p314 = pneg %p235
      %p315 = pneg %p232
      %p316 = scmp.lt.s32.totalorder %s20, 1
      %s317 = scalar_select %p316, %s20, 1
      %s318 = smul.addr %s317, 8
      %s319 = scalar_lea.vmem %s9, %s318
      %p320 = scmp.lt.s32.totalorder %s20, 1
      %s321 = scalar_select %p320, %s20, 1
      %s322 = smul.addr %s321, 8
      %s323 = scalar_lea.vmem %s0, %s322
      %p324 = scmp.lt.s32.totalorder %s20, 1
      %s325 = scalar_select %p324, %s20, 1
      %s326 = smul.addr %s325, 8
      %s327 = scalar_lea.vmem %s9, %s326
      %v328 = vld [vmem:[%s323] sm:$0xff]
      %v329 = vld [vmem:[%s1] sm:$0xff]
      %v330 = vld [vmem:[%s1 + $0x8] sm:$0xff]
      %v331 = vld [vmem:[%s1 + $0x10] sm:$0xff]
      %v332 = vld [vmem:[%s1 + $0x18] sm:$0xff]
      %v333 = vld [vmem:[%s1 + $0x20] sm:$0xff]
      %v334 = vld [vmem:[%s1 + $0x28] sm:$0xff]
      %v335 = vld [vmem:[%s1 + $0x30] sm:$0xff]
      %v336 = vld [vmem:[%s1 + $0x38] sm:$0xff]
      %v337 = vld [vmem:[%s1 + $0x40] sm:$0xff]
      %v338 = vld [vmem:[%s1 + $0x48] sm:$0xff]
      %v339 = vld [vmem:[%s1 + $0x50] sm:$0xff]
      %v340 = vld [vmem:[%s1 + $0x58] sm:$0xff]
      %v341 = vld [vmem:[%s1 + $0x60] sm:$0xff]
      %v342 = vld [vmem:[%s1 + $0x68] sm:$0xff]
      %v343 = vld [vmem:[%s1 + $0x70] sm:$0xff]
      %v344 = vld [vmem:[%s1 + $0x78] sm:$0xff]
      %v345 = vld [vmem:[%s2] sm:$0x1]
      %v347 = vlaneseq
      %v348 = vshrl.u32 %v347, 7
      %v349 = vsub.s32 0, %v348
      %v350 = vrot.slane %v345, %v349
      %352 = vmatprep.subr.mxu0 0.0
      %353 = vmatpush1.msra.mxu0 %v344
      %354 = vmatprep.subr.mxu0 0.0
      %355 = vmatpush1.msra.mxu0 %v343
      %356 = vmatprep.subr.mxu0 0.0
      %357 = vmatpush1.msra.mxu0 %v342
      %358 = vmatprep.subr.mxu0 0.0
      %359 = vmatpush1.msra.mxu0 %v341
      %360 = vmatprep.subr.mxu0 0.0
      %361 = vmatpush1.msra.mxu0 %v340
      %362 = vmatprep.subr.mxu0 0.0
      %363 = vmatpush1.msra.mxu0 %v339
      %364 = vmatprep.subr.mxu0 0.0
      %365 = vmatpush1.msra.mxu0 %v338
      %366 = vmatprep.subr.mxu0 0.0
      %367 = vmatpush1.msra.mxu0 %v337
      %368 = vmatprep.subr.mxu0 0.0
      %369 = vmatpush1.msra.mxu0 %v336
      %370 = vmatprep.subr.mxu0 0.0
      %371 = vmatpush1.msra.mxu0 %v335
      %372 = vmatprep.subr.mxu0 0.0
      %373 = vmatpush1.msra.mxu0 %v334
      %374 = vmatprep.subr.mxu0 0.0
      %375 = vmatpush1.msra.mxu0 %v333
      %376 = vmatprep.subr.mxu0 0.0
      %377 = vmatpush1.msra.mxu0 %v332
      %378 = vmatprep.subr.mxu0 0.0
      %379 = vmatpush1.msra.mxu0 %v331
      %380 = vmatprep.subr.mxu0 0.0
      %381 = vmatpush1.msra.mxu0 %v330
      %382 = vmatprep.subr.mxu0 0.0
      %383 = vmatpush1.msra.mxu0 %v329
      %384 = vmatprep.subr.mxu0 0.0
      %385 = vmatpush2.msra.mxu0 0.0
      %386 = vmatprep.subr.mxu0 0.0
      %387 = vmatpush2.msra.mxu0 0.0
      %388 = vmatprep.subr.mxu0 0.0
      %389 = vmatpush2.msra.mxu0 0.0
      %390 = vmatprep.subr.mxu0 0.0
      %391 = vmatpush2.msra.mxu0 0.0
      %392 = vmatprep.subr.mxu0 0.0
      %393 = vmatpush2.msra.mxu0 0.0
      %394 = vmatprep.subr.mxu0 0.0
      %395 = vmatpush2.msra.mxu0 0.0
      %396 = vmatprep.subr.mxu0 0.0
      %397 = vmatpush2.msra.mxu0 0.0
      %398 = vmatprep.subr.mxu0 0.0
      %399 = vmatpush2.msra.mxu0 0.0
      %400 = vmatprep.subr.mxu0 0.0
      %401 = vmatpush2.msra.mxu0 0.0
      %402 = vmatprep.subr.mxu0 0.0
      %403 = vmatpush2.msra.mxu0 0.0
      %404 = vmatprep.subr.mxu0 0.0
      %405 = vmatpush2.msra.mxu0 0.0
      %406 = vmatprep.subr.mxu0 0.0
      %407 = vmatpush2.msra.mxu0 0.0
      %408 = vmatprep.subr.mxu0 0.0
      %409 = vmatpush2.msra.mxu0 0.0
      %410 = vmatprep.subr.mxu0 0.0
      %411 = vmatpush2.msra.mxu0 0.0
      %412 = vmatprep.subr.mxu0 0.0
      %413 = vmatpush2.msra.mxu0 0.0
      %414 = vmatprep.subr.mxu0 0.0
      %415 = vmatpush2.msra.mxu0 0.0
      %416 = vmatprep.mubr.f32.mxu0 0.0
      %417 = vmatmul.mubr.f32.gmra.mxu0 %v328
      %v418 = vpop.f32.mrf.mxu0
      %v419 = vadd.f32 %v350, %v418
      %v420 = vpop.f32.mrf.mxu0
      %421 = vdwg.mxu0
      %v422 = vmul.f32 %v419, 0.5
      %v423 = vmul.f32 %v419, 0.70710677
      %v424 = verf.f32.pop %v423
      %v425 = vadd.f32 %v424, 1.0
      %v426 = vmul.f32 %v422, %v425
      %v427 = vld [vmem:[%s3] sm:$0xff]
      %v428 = vld [vmem:[%s3 + $0x8] sm:$0xff]
      %v429 = vld [vmem:[%s3 + $0x10] sm:$0xff]
      %v430 = vld [vmem:[%s3 + $0x18] sm:$0xff]
      %v431 = vld [vmem:[%s3 + $0x20] sm:$0xff]
      %v432 = vld [vmem:[%s3 + $0x28] sm:$0xff]
      %v433 = vld [vmem:[%s3 + $0x30] sm:$0xff]
      %v434 = vld [vmem:[%s3 + $0x38] sm:$0xff]
      %v435 = vld [vmem:[%s3 + $0x40] sm:$0xff]
      %v436 = vld [vmem:[%s3 + $0x48] sm:$0xff]
      %v437 = vld [vmem:[%s3 + $0x50] sm:$0xff]
      %v438 = vld [vmem:[%s3 + $0x58] sm:$0xff]
      %v439 = vld [vmem:[%s3 + $0x60] sm:$0xff]
      %v440 = vld [vmem:[%s3 + $0x68] sm:$0xff]
      %v441 = vld [vmem:[%s3 + $0x70] sm:$0xff]
      %v442 = vld [vmem:[%s3 + $0x78] sm:$0xff]
      %v443 = vld [vmem:[%s4] sm:$0x1]
      %v445 = vlaneseq
      %v446 = vshrl.u32 %v445, 7
      %v447 = vsub.s32 0, %v446
      %v448 = vrot.slane %v443, %v447
      %450 = vmatprep.subr.mxu0 0.0
      %451 = vmatpush1.msra.mxu0 %v442
      %452 = vmatprep.subr.mxu0 0.0
      %453 = vmatpush1.msra.mxu0 %v441
      %454 = vmatprep.subr.mxu0 0.0
      %455 = vmatpush1.msra.mxu0 %v440
      %456 = vmatprep.subr.mxu0 0.0
      %457 = vmatpush1.msra.mxu0 %v439
      %458 = vmatprep.subr.mxu0 0.0
      %459 = vmatpush1.msra.mxu0 %v438
      %460 = vmatprep.subr.mxu0 0.0
      %461 = vmatpush1.msra.mxu0 %v437
      %462 = vmatprep.subr.mxu0 0.0
      %463 = vmatpush1.msra.mxu0 %v436
      %464 = vmatprep.subr.mxu0 0.0
      %465 = vmatpush1.msra.mxu0 %v435
      %466 = vmatprep.subr.mxu0 0.0
      %467 = vmatpush1.msra.mxu0 %v434
      %468 = vmatprep.subr.mxu0 0.0
      %469 = vmatpush1.msra.mxu0 %v433
      %470 = vmatprep.subr.mxu0 0.0
      %471 = vmatpush1.msra.mxu0 %v432
      %472 = vmatprep.subr.mxu0 0.0
      %473 = vmatpush1.msra.mxu0 %v431
      %474 = vmatprep.subr.mxu0 0.0
      %475 = vmatpush1.msra.mxu0 %v430
      %476 = vmatprep.subr.mxu0 0.0
      %477 = vmatpush1.msra.mxu0 %v429
      %478 = vmatprep.subr.mxu0 0.0
      %479 = vmatpush1.msra.mxu0 %v428
      %480 = vmatprep.subr.mxu0 0.0
      %481 = vmatpush1.msra.mxu0 %v427
      %482 = vmatprep.subr.mxu0 0.0
      %483 = vmatpush2.msra.mxu0 0.0
      %484 = vmatprep.subr.mxu0 0.0
      %485 = vmatpush2.msra.mxu0 0.0
      %486 = vmatprep.subr.mxu0 0.0
      %487 = vmatpush2.msra.mxu0 0.0
      %488 = vmatprep.subr.mxu0 0.0
      %489 = vmatpush2.msra.mxu0 0.0
      %490 = vmatprep.subr.mxu0 0.0
      %491 = vmatpush2.msra.mxu0 0.0
      %492 = vmatprep.subr.mxu0 0.0
      %493 = vmatpush2.msra.mxu0 0.0
      %494 = vmatprep.subr.mxu0 0.0
      %495 = vmatpush2.msra.mxu0 0.0
      %496 = vmatprep.subr.mxu0 0.0
      %497 = vmatpush2.msra.mxu0 0.0
      %498 = vmatprep.subr.mxu0 0.0
      %499 = vmatpush2.msra.mxu0 0.0
      %500 = vmatprep.subr.mxu0 0.0
      %501 = vmatpush2.msra.mxu0 0.0
      %502 = vmatprep.subr.mxu0 0.0
      %503 = vmatpush2.msra.mxu0 0.0
      %504 = vmatprep.subr.mxu0 0.0
      %505 = vmatpush2.msra.mxu0 0.0
      %506 = vmatprep.subr.mxu0 0.0
      %507 = vmatpush2.msra.mxu0 0.0
      %508 = vmatprep.subr.mxu0 0.0
      %509 = vmatpush2.msra.mxu0 0.0
      %510 = vmatprep.subr.mxu0 0.0
      %511 = vmatpush2.msra.mxu0 0.0
      %512 = vmatprep.subr.mxu0 0.0
      %513 = vmatpush2.msra.mxu0 0.0
      %514 = vmatprep.mubr.f32.mxu0 0.0
      %515 = vmatmul.mubr.f32.gmra.mxu0 %v426
      %v516 = vpop.f32.mrf.mxu0
      %v517 = vadd.f32 %v448, %v516
      %v518 = vpop.f32.mrf.mxu0
      %519 = vdwg.mxu0
      %v520 = vmul.f32 %v517, 0.5
      %v521 = vmul.f32 %v517, 0.70710677
      %v522 = verf.f32.pop %v521
      %v523 = vadd.f32 %v522, 1.0
      %v524 = vmul.f32 %v520, %v523
      %v525 = vld [vmem:[%s5] sm:$0xff]
      %v526 = vld [vmem:[%s5 + $0x8] sm:$0xff]
      %v527 = vld [vmem:[%s5 + $0x10] sm:$0xff]
      %v528 = vld [vmem:[%s5 + $0x18] sm:$0xff]
      %v529 = vld [vmem:[%s5 + $0x20] sm:$0xff]
      %v530 = vld [vmem:[%s5 + $0x28] sm:$0xff]
      %v531 = vld [vmem:[%s5 + $0x30] sm:$0xff]
      %v532 = vld [vmem:[%s5 + $0x38] sm:$0xff]
      %v533 = vld [vmem:[%s5 + $0x40] sm:$0xff]
      %v534 = vld [vmem:[%s5 + $0x48] sm:$0xff]
      %v535 = vld [vmem:[%s5 + $0x50] sm:$0xff]
      %v536 = vld [vmem:[%s5 + $0x58] sm:$0xff]
      %v537 = vld [vmem:[%s5 + $0x60] sm:$0xff]
      %v538 = vld [vmem:[%s5 + $0x68] sm:$0xff]
      %v539 = vld [vmem:[%s5 + $0x70] sm:$0xff]
      %v540 = vld [vmem:[%s5 + $0x78] sm:$0xff]
      %v541 = vld [vmem:[%s6] sm:$0x1]
      %v543 = vlaneseq
      %v544 = vshrl.u32 %v543, 7
      %v545 = vsub.s32 0, %v544
      %v546 = vrot.slane %v541, %v545
      %548 = vmatprep.subr.mxu0 0.0
      %549 = vmatpush1.msra.mxu0 %v540
      %550 = vmatprep.subr.mxu0 0.0
      %551 = vmatpush1.msra.mxu0 %v539
      %552 = vmatprep.subr.mxu0 0.0
      %553 = vmatpush1.msra.mxu0 %v538
      %554 = vmatprep.subr.mxu0 0.0
      %555 = vmatpush1.msra.mxu0 %v537
      %556 = vmatprep.subr.mxu0 0.0
      %557 = vmatpush1.msra.mxu0 %v536
      %558 = vmatprep.subr.mxu0 0.0
      %559 = vmatpush1.msra.mxu0 %v535
      %560 = vmatprep.subr.mxu0 0.0
      %561 = vmatpush1.msra.mxu0 %v534
      %562 = vmatprep.subr.mxu0 0.0
      %563 = vmatpush1.msra.mxu0 %v533
      %564 = vmatprep.subr.mxu0 0.0
      %565 = vmatpush1.msra.mxu0 %v532
      %566 = vmatprep.subr.mxu0 0.0
      %567 = vmatpush1.msra.mxu0 %v531
      %568 = vmatprep.subr.mxu0 0.0
      %569 = vmatpush1.msra.mxu0 %v530
      %570 = vmatprep.subr.mxu0 0.0
      %571 = vmatpush1.msra.mxu0 %v529
      %572 = vmatprep.subr.mxu0 0.0
      %573 = vmatpush1.msra.mxu0 %v528
      %574 = vmatprep.subr.mxu0 0.0
      %575 = vmatpush1.msra.mxu0 %v527
      %576 = vmatprep.subr.mxu0 0.0
      %577 = vmatpush1.msra.mxu0 %v526
      %578 = vmatprep.subr.mxu0 0.0
      %579 = vmatpush1.msra.mxu0 %v525
      %580 = vmatprep.subr.mxu0 0.0
      %581 = vmatpush2.msra.mxu0 0.0
      %582 = vmatprep.subr.mxu0 0.0
      %583 = vmatpush2.msra.mxu0 0.0
      %584 = vmatprep.subr.mxu0 0.0
      %585 = vmatpush2.msra.mxu0 0.0
      %586 = vmatprep.subr.mxu0 0.0
      %587 = vmatpush2.msra.mxu0 0.0
      %588 = vmatprep.subr.mxu0 0.0
      %589 = vmatpush2.msra.mxu0 0.0
      %590 = vmatprep.subr.mxu0 0.0
      %591 = vmatpush2.msra.mxu0 0.0
      %592 = vmatprep.subr.mxu0 0.0
      %593 = vmatpush2.msra.mxu0 0.0
      %594 = vmatprep.subr.mxu0 0.0
      %595 = vmatpush2.msra.mxu0 0.0
      %596 = vmatprep.subr.mxu0 0.0
      %597 = vmatpush2.msra.mxu0 0.0
      %598 = vmatprep.subr.mxu0 0.0
      %599 = vmatpush2.msra.mxu0 0.0
      %600 = vmatprep.subr.mxu0 0.0
      %601 = vmatpush2.msra.mxu0 0.0
      %602 = vmatprep.subr.mxu0 0.0
      %603 = vmatpush2.msra.mxu0 0.0
      %604 = vmatprep.subr.mxu0 0.0
      %605 = vmatpush2.msra.mxu0 0.0
      %606 = vmatprep.subr.mxu0 0.0
      %607 = vmatpush2.msra.mxu0 0.0
      %608 = vmatprep.subr.mxu0 0.0
      %609 = vmatpush2.msra.mxu0 0.0
      %610 = vmatprep.subr.mxu0 0.0
      %611 = vmatpush2.msra.mxu0 0.0
      %612 = vmatprep.mubr.f32.mxu0 0.0
      %613 = vmatmul.mubr.f32.gmra.mxu0 %v524
      %v614 = vpop.f32.mrf.mxu0
      %v615 = vadd.f32 %v546, %v614
      %v616 = vpop.f32.mrf.mxu0
      %617 = vdwg.mxu0
      %v618 = vadd.f32 %v328, %v615
      %619 = vadd.xlane.f32.xlu0 %v618
      %v620 = vpop.xlane.xlu0 %619
      %v621 = vmul.f32 %v620, 0.03125
      %v622 = vsub.f32 %v618, %v621
      %v623 = vlaneseq
      %v624 = vand.u32 %v623, 127
      %vm625 = vcmp.lt.s32.totalorder %v624, 32
      %v626 = vsel %vm625, %v622, 0.0
      %v627 = vmul.f32 %v626, %v626
      %628 = vadd.xlane.f32.xlu0 %v627
      %v629 = vpop.xlane.xlu0 %628
      %v630 = vmul.f32 %v629, 0.03125
      %v631 = vadd.f32 %v630, 1e-05
      %v632 = vrsqrt.pop %v631
      %v633 = vmul.f32 %v626, %v632
      %v634 = vld [vmem:[%s7] sm:$0x1]
      %v636 = vlaneseq
      %v637 = vshrl.u32 %v636, 7
      %v638 = vsub.s32 0, %v637
      %v639 = vrot.slane %v634, %v638
      %v641 = vmul.f32 %v633, %v639
      %v642 = vld [vmem:[%s8] sm:$0x1]
      %v644 = vlaneseq
      %v645 = vshrl.u32 %v644, 7
      %v646 = vsub.s32 0, %v645
      %v647 = vrot.slane %v642, %v646
      %v649 = vadd.f32 %v641, %v647
      %650 = vst [vmem:[%s327] sm:$0xff] %v649
      %p651 = scmp.lt.s32.totalorder %s20, 1
      %s652 = scalar_select %p651, %s20, 1
      %s653 = smul.addr %s652, 8
      %s654 = scalar_lea.vmem %s9, %s653
      // Predicated region
      $region57: #{mlp_adapter_forward.1} parent=55 // pred_check
        %p655 = pneg %p232
      $region58: #{mlp_adapter_forward.1} parent=55 // pred_check_branch
        %657 = sbr.rel (%p655) target = $region60
      $region59: #{mlp_adapter_forward.1} parent=55 // pred_region
        _
      $region60: #{mlp_adapter_forward.1} parent=55 // pred_fallthru
        _
    $region56: #{mlp_adapter_forward.1} parent=5 // pred_fallthru
      _
    %p658 = scmp.le.s32.totalorder 2, %s15
    // Predicated region
    $region61: #{mlp_adapter_forward.1} parent=5 // pred_check
      %p659 = pneg %p658
    $region62: #{mlp_adapter_forward.1} parent=5 // pred_check_branch
      %661 = sbr.rel (%p659) target = $region64
    $region63: #{mlp_adapter_forward.1} parent=5 // pred_region
      %s662 = ssub.s32 %s15, 2
      // Predicated region
      $region65: #{mlp_adapter_forward.1} parent=63 // pred_check
        %p663 = pneg %p238
      $region66: #{mlp_adapter_forward.1} parent=63 // pred_check_branch
        %665 = sbr.rel (%p663) target = $region68
      $region67: #{mlp_adapter_forward.1} parent=63 // pred_region
        %p666 = scmp.lt.s32.totalorder %s21, 1
        %s667 = scalar_select %p666, %s21, 1
        %s668 = smul.addr %s667, 8
        %s669 = scalar_lea.vmem %s9, %s668
      $region68: #{mlp_adapter_forward.1} parent=63 // pred_fallthru
        _
    $region64: #{mlp_adapter_forward.1} parent=5 // pred_fallthru
      _
  $region6: #{mlp_adapter_forward.1} parent=0 // loop_footer
    %s19 = sadd.s32 1, %s15
  $region7: #{mlp_adapter_forward.1} parent=0 // loop_footer_branch
    %14 = sbr.rel target = $region3
  $region8: #{mlp_adapter_forward.1} parent=0 // loop_exit
    _

// kernel: mlp_adapter_forward.1
$region0: #{mlp_adapter_forward.1}
  #allocation0 [shape = 'u32[]', space=smem, size = 0x4, offset = 0x4, fixed_abs, tag = 'smem constant byte address 0x4 - core index']
  #allocation1 [shape = 'u32[144,128]{1,0:T(1,128)}', space=vmem, size = 0x12000, scoped, tag = 'internal scratch']
  %s0 = inlined_call_operand.vmem [shape: f32[16,128], index: 0, kind: input, shape index: {}]
  %s1 = inlined_call_operand.vmem [shape: f32[128,128], index: 1, kind: input, shape index: {}]
  %s2 = inlined_call_operand.vmem [shape: f32[1,128], index: 2, kind: input, shape index: {}]
  %s3 = inlined_call_operand.vmem [shape: f32[128,128], index: 3, kind: input, shape index: {}]
  %s4 = inlined_call_operand.vmem [shape: f32[1,128], index: 4, kind: input, shape index: {}]
  %s5 = inlined_call_operand.vmem [shape: f32[128,128], index: 5, kind: input, shape index: {}]
  %s6 = inlined_call_operand.vmem [shape: f32[1,128], index: 6, kind: input, shape index: {}]
  %s7 = inlined_call_operand.vmem [shape: f32[1,128], index: 7, kind: input, shape index: {}]
  %s8 = inlined_call_operand.vmem [shape: f32[1,128], index: 8, kind: input, shape index: {}]
  %s9 = inlined_call_operand.vmem [shape: f32[16,128], index: 9, kind: output, shape index: {}]
  %s10 = sld [smem:[#allocation0]]
  $region69: #{mlp_adapter_forward.1} parent=0
    _
  %s12 = ssub.s32 1, %s10
  %s13 = scalar_select 0, %s12, %s10
  loop: start=0, step=1, limit=4
  $region2: #{mlp_adapter_forward.1} parent=0 // loop_pre_header
    _
  $region3: #{mlp_adapter_forward.1} parent=0 // loop_header
    %s15 = sphi 0, %s19
    %p16 = scmp.ge.s32.totalorder %s15, 4
    %s25 = sphi 0, %s27
    %s28 = sphi 0, %s25
    %s29 = sphi 0, %s28
    %s45 = sphi 0, %s29
    %s49 = sphi 0, %s49
    %s51 = sphi 0, %s49
    %s52 = sphi 0, %s51
    %s66 = sphi 0, %s52
    %s70 = sphi 0, %s70
    %s72 = sphi 0, %s70
    %s73 = sphi 0, %s72
    %s87 = sphi 0, %s73
    %s91 = sphi 0, %s91
    %s93 = sphi 0, %s91
    %s94 = sphi 0, %s93
    %s108 = sphi 0, %s94
    %s112 = sphi 0, %s112
    %s114 = sphi 0, %s112
    %s115 = sphi 0, %s114
    %s129 = sphi 0, %s115
    %s133 = sphi 0, %s133
    %s135 = sphi 0, %s133
    %s136 = sphi 0, %s135
    %s150 = sphi 0, %s136
    %s154 = sphi 0, %s154
    %s156 = sphi 0, %s154
    %s157 = sphi 0, %s156
    %s171 = sphi 0, %s157
    %s175 = sphi 0, %s175
    %s177 = sphi 0, %s175
    %s178 = sphi 0, %s177
    %s192 = sphi 0, %s178
    %s196 = sphi 0, %s196
    %s198 = sphi 0, %s196
    %s199 = sphi 0, %s198
    %s213 = sphi 0, %s199
    %s219 = sphi 0, %s221
    %s222 = sphi 0, %s219
    %s223 = sphi 0, %s222
    %s239 = sphi 0, %s223
  $region4: #{mlp_adapter_forward.1} parent=0 // loop_header_branch
    %18 = sbr.rel (%p16) target = $region8
  $region5: #{mlp_adapter_forward.1} parent=0 // loop_body
    %s20 = ssub.s32 %s15, 1
    %s21 = ssub.s32 %s15, 2
    %s22 = sadd.s32 %s15, 1
    %s23 = ssub.s32 %s15, %s22
    %p24 = scmp.eq.s32.totalorder %s23, 0
    %s26 = sadd.s32 %s25, 1
    %s27 = scalar_select %p24, %s25, %s26
    %p30 = pneg %p24
    %p31 = scmp.eq.s32.totalorder %s15, 1
    %p32 = por %p30, %p31
    %p33 = scmp.ne.s32.totalorder %s25, %s28
    %p34 = scmp.eq.s32.totalorder %s15, 0
    %p35 = por %p33, %p34
    %p36 = scmp.ne.s32.totalorder %s25, %s28
    %p37 = scmp.eq.s32.totalorder %s20, 1
    %p38 = por %p36, %p37
    %p39 = scmp.ne.s32.totalorder %s28, %s29
    %p40 = scmp.eq.s32.totalorder %s20, 0
    %p41 = por %p39, %p40
    %p42 = scmp.ne.s32.totalorder %s28, %s29
    %p43 = scmp.eq.s32.totalorder %s21, 1
    %p44 = por %p42, %p43
    %p46 = scmp.ne.s32.totalorder %s29, %s45
    %p47 = scmp.eq.s32.totalorder %s21, 0
    %p48 = por %p46, %p47
    %s50 = sadd.s32 %s49, 1
    %p53 = scmp.eq.s32.totalorder %s15, 1
    %p54 = scmp.ne.s32.totalorder %s49, %s51
    %p55 = scmp.eq.s32.totalorder %s15, 0
    %p56 = por %p54, %p55
    %p57 = scmp.ne.s32.totalorder %s49, %s51
    %p58 = scmp.eq.s32.totalorder %s20, 1
    %p59 = por %p57, %p58
    %p60 = scmp.ne.s32.totalorder %s51, %s52
    %p61 = scmp.eq.s32.totalorder %s20, 0
    %p62 = por %p60, %p61
    %p63 = scmp.ne.s32.totalorder %s51, %s52
    %p64 = scmp.eq.s32.totalorder %s21, 1
    %p65 = por %p63, %p64
    %p67 = scmp.ne.s32.totalorder %s52, %s66
    %p68 = scmp.eq.s32.totalorder %s21, 0
    %p69 = por %p67, %p68
    %s71 = sadd.s32 %s70, 1
    %p74 = scmp.eq.s32.totalorder %s15, 1
    %p75 = scmp.ne.s32.totalorder %s70, %s72
    %p76 = scmp.eq.s32.totalorder %s15, 0
    %p77 = por %p75, %p76
    %p78 = scmp.ne.s32.totalorder %s70, %s72
    %p79 = scmp.eq.s32.totalorder %s20, 1
    %p80 = por %p78, %p79
    %p81 = scmp.ne.s32.totalorder %s72, %s73
    %p82 = scmp.eq.s32.totalorder %s20, 0
    %p83 = por %p81, %p82
    %p84 = scmp.ne.s32.totalorder %s72, %s73
    %p85 = scmp.eq.s32.totalorder %s21, 1
    %p86 = por %p84, %p85
    %p88 = scmp.ne.s32.totalorder %s73, %s87
    %p89 = scmp.eq.s32.totalorder %s21, 0
    %p90 = por %p88, %p89
    %s92 = sadd.s32 %s91, 1
    %p95 = scmp.eq.s32.totalorder %s15, 1
    %p96 = scmp.ne.s32.totalorder %s91, %s93
    %p97 = scmp.eq.s32.totalorder %s15, 0
    %p98 = por %p96, %p97
    %p99 = scmp.ne.s32.totalorder %s91, %s93
    %p100 = scmp.eq.s32.totalorder %s20, 1
    %p101 = por %p99, %p100
    %p102 = scmp.ne.s32.totalorder %s93, %s94
    %p103 = scmp.eq.s32.totalorder %s20, 0
    %p104 = por %p102, %p103
    %p105 = scmp.ne.s32.totalorder %s93, %s94
    %p106 = scmp.eq.s32.totalorder %s21, 1
    %p107 = por %p105, %p106
    %p109 = scmp.ne.s32.totalorder %s94, %s108
    %p110 = scmp.eq.s32.totalorder %s21, 0
    %p111 = por %p109, %p110
    %s113 = sadd.s32 %s112, 1
    %p116 = scmp.eq.s32.totalorder %s15, 1
    %p117 = scmp.ne.s32.totalorder %s112, %s114
    %p118 = scmp.eq.s32.totalorder %s15, 0
    %p119 = por %p117, %p118
    %p120 = scmp.ne.s32.totalorder %s112, %s114
    %p121 = scmp.eq.s32.totalorder %s20, 1
    %p122 = por %p120, %p121
    %p123 = scmp.ne.s32.totalorder %s114, %s115
    %p124 = scmp.eq.s32.totalorder %s20, 0
    %p125 = por %p123, %p124
    %p126 = scmp.ne.s32.totalorder %s114, %s115
    %p127 = scmp.eq.s32.totalorder %s21, 1
    %p128 = por %p126, %p127
    %p130 = scmp.ne.s32.totalorder %s115, %s129
    %p131 = scmp.eq.s32.totalorder %s21, 0
    %p132 = por %p130, %p131
    %s134 = sadd.s32 %s133, 1
    %p137 = scmp.eq.s32.totalorder %s15, 1
    %p138 = scmp.ne.s32.totalorder %s133, %s135
    %p139 = scmp.eq.s32.totalorder %s15, 0
    %p140 = por %p138, %p139
    %p141 = scmp.ne.s32.totalorder %s133, %s135
    %p142 = scmp.eq.s32.totalorder %s20, 1
    %p143 = por %p141, %p142
    %p144 = scmp.ne.s32.totalorder %s135, %s136
    %p145 = scmp.eq.s32.totalorder %s20, 0
    %p146 = por %p144, %p145
    %p147 = scmp.ne.s32.totalorder %s135, %s136
    %p148 = scmp.eq.s32.totalorder %s21, 1
    %p149 = por %p147, %p148
    %p151 = scmp.ne.s32.totalorder %s136, %s150
    %p152 = scmp.eq.s32.totalorder %s21, 0
    %p153 = por %p151, %p152
    %s155 = sadd.s32 %s154, 1
    %p158 = scmp.eq.s32.totalorder %s15, 1
    %p159 = scmp.ne.s32.totalorder %s154, %s156
    %p160 = scmp.eq.s32.totalorder %s15, 0
    %p161 = por %p159, %p160
    %p162 = scmp.ne.s32.totalorder %s154, %s156
    %p163 = scmp.eq.s32.totalorder %s20, 1
    %p164 = por %p162, %p163
    %p165 = scmp.ne.s32.totalorder %s156, %s157
    %p166 = scmp.eq.s32.totalorder %s20, 0
    %p167 = por %p165, %p166
    %p168 = scmp.ne.s32.totalorder %s156, %s157
    %p169 = scmp.eq.s32.totalorder %s21, 1
    %p170 = por %p168, %p169
    %p172 = scmp.ne.s32.totalorder %s157, %s171
    %p173 = scmp.eq.s32.totalorder %s21, 0
    %p174 = por %p172, %p173
    %s176 = sadd.s32 %s175, 1
    %p179 = scmp.eq.s32.totalorder %s15, 1
    %p180 = scmp.ne.s32.totalorder %s175, %s177
    %p181 = scmp.eq.s32.totalorder %s15, 0
    %p182 = por %p180, %p181
    %p183 = scmp.ne.s32.totalorder %s175, %s177
    %p184 = scmp.eq.s32.totalorder %s20, 1
    %p185 = por %p183, %p184
    %p186 = scmp.ne.s32.totalorder %s177, %s178
    %p187 = scmp.eq.s32.totalorder %s20, 0
    %p188 = por %p186, %p187
    %p189 = scmp.ne.s32.totalorder %s177, %s178
    %p190 = scmp.eq.s32.totalorder %s21, 1
    %p191 = por %p189, %p190
    %p193 = scmp.ne.s32.totalorder %s178, %s192
    %p194 = scmp.eq.s32.totalorder %s21, 0
    %p195 = por %p193, %p194
    %s197 = sadd.s32 %s196, 1
    %p200 = scmp.eq.s32.totalorder %s15, 1
    %p201 = scmp.ne.s32.totalorder %s196, %s198
    %p202 = scmp.eq.s32.totalorder %s15, 0
    %p203 = por %p201, %p202
    %p204 = scmp.ne.s32.totalorder %s196, %s198
    %p205 = scmp.eq.s32.totalorder %s20, 1
    %p206 = por %p204, %p205
    %p207 = scmp.ne.s32.totalorder %s198, %s199
    %p208 = scmp.eq.s32.totalorder %s20, 0
    %p209 = por %p207, %p208
    %p210 = scmp.ne.s32.totalorder %s198, %s199
    %p211 = scmp.eq.s32.totalorder %s21, 1
    %p212 = por %p210, %p211
    %p214 = scmp.ne.s32.totalorder %s199, %s213
    %p215 = scmp.eq.s32.totalorder %s21, 0
    %p216 = por %p214, %p215
    %s217 = ssub.s32 %s15, %s22
    %p218 = scmp.eq.s32.totalorder %s217, 0
    %s220 = sadd.s32 %s219, 1
    %s221 = scalar_select %p218, %s219, %s220
    %p224 = pneg %p218
    %p225 = scmp.eq.s32.totalorder %s15, 1
    %p226 = por %p224, %p225
    %p227 = scmp.ne.s32.totalorder %s219, %s222
    %p228 = scmp.eq.s32.totalorder %s15, 0
    %p229 = por %p227, %p228
    %p230 = scmp.ne.s32.totalorder %s219, %s222
    %p231 = scmp.eq.s32.totalorder %s20, 1
    %p232 = por %p230, %p231
    %p233 = scmp.ne.s32.totalorder %s222, %s223
    %p234 = scmp.eq.s32.totalorder %s20, 0
    %p235 = por %p233, %p234
    %p236 = scmp.ne.s32.totalorder %s222, %s223
    %p237 = scmp.eq.s32.totalorder %s21, 1
    %p238 = por %p236, %p237
    %p240 = scmp.ne.s32.totalorder %s223, %s239
    %p241 = scmp.eq.s32.totalorder %s21, 0
    %p242 = por %p240, %p241
    %p243 = scmp.le.s32.totalorder 1, %s15
    %p244 = scmp.lt.s32.totalorder %s15, 3
    %p245 = pnand %p243, %p244
    %p246 = pneg %p245
    // Predicated region
    $region9: #{mlp_adapter_forward.1} parent=5 // pred_check
      _
    $region10: #{mlp_adapter_forward.1} parent=5 // pred_check_branch
      %248 = sbr.rel (%p245) target = $region12
    $region11: #{mlp_adapter_forward.1} parent=5 // pred_region
      %s249 = ssub.s32 %s15, 1
      // Predicated region
      $region13: #{mlp_adapter_forward.1} parent=11 // pred_check
        %p250 = pneg %p62
      $region14: #{mlp_adapter_forward.1} parent=11 // pred_check_branch
        %252 = sbr.rel (%p250) target = $region16
      $region15: #{mlp_adapter_forward.1} parent=11 // pred_region
        _
      $region16: #{mlp_adapter_forward.1} parent=11 // pred_fallthru
        _
      // Predicated region
      $region17: #{mlp_adapter_forward.1} parent=11 // pred_check
        %p253 = pneg %p83
      $region18: #{mlp_adapter_forward.1} parent=11 // pred_check_branch
        %255 = sbr.rel (%p253) target = $region20
      $region19: #{mlp_adapter_forward.1} parent=11 // pred_region
        _
      $region20: #{mlp_adapter_forward.1} parent=11 // pred_fallthru
        _
      // Predicated region
      $region21: #{mlp_adapter_forward.1} parent=11 // pred_check
        %p256 = pneg %p104
      $region22: #{mlp_adapter_forward.1} parent=11 // pred_check_branch
        %258 = sbr.rel (%p256) target = $region24
      $region23: #{mlp_adapter_forward.1} parent=11 // pred_region
        _
      $region24: #{mlp_adapter_forward.1} parent=11 // pred_fallthru
        _
      // Predicated region
      $region25: #{mlp_adapter_forward.1} parent=11 // pred_check
        %p259 = pneg %p125
      $region26: #{mlp_adapter_forward.1} parent=11 // pred_check_branch
        %261 = sbr.rel (%p259) target = $region28
      $region27: #{mlp_adapter_forward.1} parent=11 // pred_region
        _
      $region28: #{mlp_adapter_forward.1} parent=11 // pred_fallthru
        _
      // Predicated region
      $region29: #{mlp_adapter_forward.1} parent=11 // pred_check
        %p262 = pneg %p146
      $region30: #{mlp_adapter_forward.1} parent=11 // pred_check_branch
        %264 = sbr.rel (%p262) target = $region32
      $region31: #{mlp_adapter_forward.1} parent=11 // pred_region
        _
      $region32: #{mlp_adapter_forward.1} parent=11 // pred_fallthru
        _
      // Predicated region
      $region33: #{mlp_adapter_forward.1} parent=11 // pred_check
        %p265 = pneg %p167
      $region34: #{mlp_adapter_forward.1} parent=11 // pred_check_branch
        %267 = sbr.rel (%p265) target = $region36
      $region35: #{mlp_adapter_forward.1} parent=11 // pred_region
        _
      $region36: #{mlp_adapter_forward.1} parent=11 // pred_fallthru
        _
      // Predicated region
      $region37: #{mlp_adapter_forward.1} parent=11 // pred_check
        %p268 = pneg %p188
      $region38: #{mlp_adapter_forward.1} parent=11 // pred_check_branch
        %270 = sbr.rel (%p268) target = $region40
      $region39: #{mlp_adapter_forward.1} parent=11 // pred_region
        _
      $region40: #{mlp_adapter_forward.1} parent=11 // pred_fallthru
        _
      // Predicated region
      $region41: #{mlp_adapter_forward.1} parent=11 // pred_check
        %p271 = pneg %p209
      $region42: #{mlp_adapter_forward.1} parent=11 // pred_check_branch
        %273 = sbr.rel (%p271) target = $region44
      $region43: #{mlp_adapter_forward.1} parent=11 // pred_region
        _
      $region44: #{mlp_adapter_forward.1} parent=11 // pred_fallthru
        _
    $region12: #{mlp_adapter_forward.1} parent=5 // pred_fallthru
      _
    %p274 = scmp.lt.s32.totalorder %s15, 2
    // Predicated region
    $region45: #{mlp_adapter_forward.1} parent=5 // pred_check
      %p275 = pneg %p274
    $region46: #{mlp_adapter_forward.1} parent=5 // pred_check_branch
      %277 = sbr.rel (%p275) target = $region48
    $region47: #{mlp_adapter_forward.1} parent=5 // pred_region
      // Predicated region
      $region49: #{mlp_adapter_forward.1} parent=47 // pred_check
        %p278 = pneg %p35
      $region50: #{mlp_adapter_forward.1} parent=47 // pred_check_branch
        %280 = sbr.rel (%p278) target = $region52
      $region51: #{mlp_adapter_forward.1} parent=47 // pred_region
        %p281 = scmp.lt.s32.totalorder %s15, 1
        %s282 = scalar_select %p281, %s15, 1
        %s283 = smul.addr %s282, 8
        %s284 = scalar_lea.vmem %s0, %s283
      $region52: #{mlp_adapter_forward.1} parent=47 // pred_fallthru
        _
    $region48: #{mlp_adapter_forward.1} parent=5 // pred_fallthru
      _
    %p285 = scmp.le.s32.totalorder 1, %s15
    %p286 = scmp.lt.s32.totalorder %s15, 3
    %p287 = pnand %p285, %p286
    %p288 = pneg %p287
    // Predicated region
    $region53: #{mlp_adapter_forward.1} parent=5 // pred_check
      _
    $region54: #{mlp_adapter_forward.1} parent=5 // pred_check_branch
      %290 = sbr.rel (%p287) target = $region56
    $region55: #{mlp_adapter_forward.1} parent=5 // pred_region
      %s291 = ssub.s32 %s15, 1
      %p292 = scmp.lt.s32.totalorder %s20, 1
      %s293 = scalar_select %p292, %s20, 1
      %s294 = smul.addr %s293, 8
      %s295 = scalar_lea.vmem %s0, %s294
      %p296 = pneg %p41
      %p297 = pneg %p38
      %p298 = pneg %p62
      %p299 = pneg %p59
      %p300 = pneg %p83
      %p301 = pneg %p80
      %p302 = pneg %p104
      %p303 = pneg %p101
      %p304 = pneg %p125
      %p305 = pneg %p122
      %p306 = pneg %p146
      %p307 = pneg %p143
      %p308 = pneg %p167
      %p309 = pneg %p164
      %p310 = pneg %p188
      %p311 = pneg %p185
      %p312 = pneg %p209
      %p313 = pneg %p206
      %p314 = pneg %p235
      %p315 = pneg %p232
      %p316 = scmp.lt.s32.totalorder %s20, 1
      %s317 = scalar_select %p316, %s20, 1
      %s318 = smul.addr %s317, 8
      %s319 = scalar_lea.vmem %s9, %s318
      %p320 = scmp.lt.s32.totalorder %s20, 1
      %s321 = scalar_select %p320, %s20, 1
      %s322 = smul.addr %s321, 8
      %s323 = scalar_lea.vmem %s0, %s322
      %p324 = scmp.lt.s32.totalorder %s20, 1
      %s325 = scalar_select %p324, %s20, 1
      %s326 = smul.addr %s325, 8
      %s327 = scalar_lea.vmem %s9, %s326
      %v328 = vld [vmem:[%s323] sm:$0xff]
      %v329 = vld [vmem:[%s1] sm:$0xff]
      %v330 = vld [vmem:[%s1 + $0x8] sm:$0xff]
      %v331 = vld [vmem:[%s1 + $0x10] sm:$0xff]
      %v332 = vld [vmem:[%s1 + $0x18] sm:$0xff]
      %v333 = vld [vmem:[%s1 + $0x20] sm:$0xff]
      %v334 = vld [vmem:[%s1 + $0x28] sm:$0xff]
      %v335 = vld [vmem:[%s1 + $0x30] sm:$0xff]
      %v336 = vld [vmem:[%s1 + $0x38] sm:$0xff]
      %v337 = vld [vmem:[%s1 + $0x40] sm:$0xff]
      %v338 = vld [vmem:[%s1 + $0x48] sm:$0xff]
      %v339 = vld [vmem:[%s1 + $0x50] sm:$0xff]
      %v340 = vld [vmem:[%s1 + $0x58] sm:$0xff]
      %v341 = vld [vmem:[%s1 + $0x60] sm:$0xff]
      %v342 = vld [vmem:[%s1 + $0x68] sm:$0xff]
      %v343 = vld [vmem:[%s1 + $0x70] sm:$0xff]
      %v344 = vld [vmem:[%s1 + $0x78] sm:$0xff]
      %v345 = vld [vmem:[%s2] sm:$0x1]
      %v347 = vlaneseq
      %v348 = vshrl.u32 %v347, 7
      %v349 = vsub.s32 0, %v348
      %v350 = vrot.slane %v345, %v349
      %352 = vmatprep.subr.mxu0 0.0
      %353 = vmatpush1.msra.mxu0 %v344
      %354 = vmatprep.subr.mxu0 0.0
      %355 = vmatpush1.msra.mxu0 %v343
      %356 = vmatprep.subr.mxu0 0.0
      %357 = vmatpush1.msra.mxu0 %v342
      %358 = vmatprep.subr.mxu0 0.0
      %359 = vmatpush1.msra.mxu0 %v341
      %360 = vmatprep.subr.mxu0 0.0
      %361 = vmatpush1.msra.mxu0 %v340
      %362 = vmatprep.subr.mxu0 0.0
      %363 = vmatpush1.msra.mxu0 %v339
      %364 = vmatprep.subr.mxu0 0.0
      %365 = vmatpush1.msra.mxu0 %v338
      %366 = vmatprep.subr.mxu0 0.0
      %367 = vmatpush1.msra.mxu0 %v337
      %368 = vmatprep.subr.mxu0 0.0
      %369 = vmatpush1.msra.mxu0 %v336
      %370 = vmatprep.subr.mxu0 0.0
      %371 = vmatpush1.msra.mxu0 %v335
      %372 = vmatprep.subr.mxu0 0.0
      %373 = vmatpush1.msra.mxu0 %v334
      %374 = vmatprep.subr.mxu0 0.0
      %375 = vmatpush1.msra.mxu0 %v333
      %376 = vmatprep.subr.mxu0 0.0
      %377 = vmatpush1.msra.mxu0 %v332
      %378 = vmatprep.subr.mxu0 0.0
      %379 = vmatpush1.msra.mxu0 %v331
      %380 = vmatprep.subr.mxu0 0.0
      %381 = vmatpush1.msra.mxu0 %v330
      %382 = vmatprep.subr.mxu0 0.0
      %383 = vmatpush1.msra.mxu0 %v329
      %384 = vmatprep.subr.mxu0 0.0
      %385 = vmatpush2.msra.mxu0 0.0
      %386 = vmatprep.subr.mxu0 0.0
      %387 = vmatpush2.msra.mxu0 0.0
      %388 = vmatprep.subr.mxu0 0.0
      %389 = vmatpush2.msra.mxu0 0.0
      %390 = vmatprep.subr.mxu0 0.0
      %391 = vmatpush2.msra.mxu0 0.0
      %392 = vmatprep.subr.mxu0 0.0
      %393 = vmatpush2.msra.mxu0 0.0
      %394 = vmatprep.subr.mxu0 0.0
      %395 = vmatpush2.msra.mxu0 0.0
      %396 = vmatprep.subr.mxu0 0.0
      %397 = vmatpush2.msra.mxu0 0.0
      %398 = vmatprep.subr.mxu0 0.0
      %399 = vmatpush2.msra.mxu0 0.0
      %400 = vmatprep.subr.mxu0 0.0
      %401 = vmatpush2.msra.mxu0 0.0
      %402 = vmatprep.subr.mxu0 0.0
      %403 = vmatpush2.msra.mxu0 0.0
      %404 = vmatprep.subr.mxu0 0.0
      %405 = vmatpush2.msra.mxu0 0.0
      %406 = vmatprep.subr.mxu0 0.0
      %407 = vmatpush2.msra.mxu0 0.0
      %408 = vmatprep.subr.mxu0 0.0
      %409 = vmatpush2.msra.mxu0 0.0
      %410 = vmatprep.subr.mxu0 0.0
      %411 = vmatpush2.msra.mxu0 0.0
      %412 = vmatprep.subr.mxu0 0.0
      %413 = vmatpush2.msra.mxu0 0.0
      %414 = vmatprep.subr.mxu0 0.0
      %415 = vmatpush2.msra.mxu0 0.0
      %416 = vmatprep.mubr.f32.mxu0 0.0
      %417 = vmatmul.mubr.f32.gmra.mxu0 %v328
      %v418 = vpop.f32.mrf.mxu0
      %v419 = vadd.f32 %v350, %v418
      %v420 = vpop.f32.mrf.mxu0
      %421 = vdwg.mxu0
      %v422 = vmul.f32 %v419, 0.5
      %v423 = vmul.f32 %v419, 0.70710677
      %v424 = verf.f32.pop %v423
      %v425 = vadd.f32 %v424, 1.0
      %v426 = vmul.f32 %v422, %v425
      %v427 = vld [vmem:[%s3] sm:$0xff]
      %v428 = vld [vmem:[%s3 + $0x8] sm:$0xff]
      %v429 = vld [vmem:[%s3 + $0x10] sm:$0xff]
      %v430 = vld [vmem:[%s3 + $0x18] sm:$0xff]
      %v431 = vld [vmem:[%s3 + $0x20] sm:$0xff]
      %v432 = vld [vmem:[%s3 + $0x28] sm:$0xff]
      %v433 = vld [vmem:[%s3 + $0x30] sm:$0xff]
      %v434 = vld [vmem:[%s3 + $0x38] sm:$0xff]
      %v435 = vld [vmem:[%s3 + $0x40] sm:$0xff]
      %v436 = vld [vmem:[%s3 + $0x48] sm:$0xff]
      %v437 = vld [vmem:[%s3 + $0x50] sm:$0xff]
      %v438 = vld [vmem:[%s3 + $0x58] sm:$0xff]
      %v439 = vld [vmem:[%s3 + $0x60] sm:$0xff]
      %v440 = vld [vmem:[%s3 + $0x68] sm:$0xff]
      %v441 = vld [vmem:[%s3 + $0x70] sm:$0xff]
      %v442 = vld [vmem:[%s3 + $0x78] sm:$0xff]
      %v443 = vld [vmem:[%s4] sm:$0x1]
      %v445 = vlaneseq
      %v446 = vshrl.u32 %v445, 7
      %v447 = vsub.s32 0, %v446
      %v448 = vrot.slane %v443, %v447
      %450 = vmatprep.subr.mxu0 0.0
      %451 = vmatpush1.msra.mxu0 %v442
      %452 = vmatprep.subr.mxu0 0.0
      %453 = vmatpush1.msra.mxu0 %v441
      %454 = vmatprep.subr.mxu0 0.0
      %455 = vmatpush1.msra.mxu0 %v440
      %456 = vmatprep.subr.mxu0 0.0
      %457 = vmatpush1.msra.mxu0 %v439
      %458 = vmatprep.subr.mxu0 0.0
      %459 = vmatpush1.msra.mxu0 %v438
      %460 = vmatprep.subr.mxu0 0.0
      %461 = vmatpush1.msra.mxu0 %v437
      %462 = vmatprep.subr.mxu0 0.0
      %463 = vmatpush1.msra.mxu0 %v436
      %464 = vmatprep.subr.mxu0 0.0
      %465 = vmatpush1.msra.mxu0 %v435
      %466 = vmatprep.subr.mxu0 0.0
      %467 = vmatpush1.msra.mxu0 %v434
      %468 = vmatprep.subr.mxu0 0.0
      %469 = vmatpush1.msra.mxu0 %v433
      %470 = vmatprep.subr.mxu0 0.0
      %471 = vmatpush1.msra.mxu0 %v432
      %472 = vmatprep.subr.mxu0 0.0
      %473 = vmatpush1.msra.mxu0 %v431
      %474 = vmatprep.subr.mxu0 0.0
      %475 = vmatpush1.msra.mxu0 %v430
      %476 = vmatprep.subr.mxu0 0.0
      %477 = vmatpush1.msra.mxu0 %v429
      %478 = vmatprep.subr.mxu0 0.0
      %479 = vmatpush1.msra.mxu0 %v428
      %480 = vmatprep.subr.mxu0 0.0
      %481 = vmatpush1.msra.mxu0 %v427
      %482 = vmatprep.subr.mxu0 0.0
      %483 = vmatpush2.msra.mxu0 0.0
      %484 = vmatprep.subr.mxu0 0.0
      %485 = vmatpush2.msra.mxu0 0.0
      %486 = vmatprep.subr.mxu0 0.0
      %487 = vmatpush2.msra.mxu0 0.0
      %488 = vmatprep.subr.mxu0 0.0
      %489 = vmatpush2.msra.mxu0 0.0
      %490 = vmatprep.subr.mxu0 0.0
      %491 = vmatpush2.msra.mxu0 0.0
      %492 = vmatprep.subr.mxu0 0.0
      %493 = vmatpush2.msra.mxu0 0.0
      %494 = vmatprep.subr.mxu0 0.0
      %495 = vmatpush2.msra.mxu0 0.0
      %496 = vmatprep.subr.mxu0 0.0
      %497 = vmatpush2.msra.mxu0 0.0
      %498 = vmatprep.subr.mxu0 0.0
      %499 = vmatpush2.msra.mxu0 0.0
      %500 = vmatprep.subr.mxu0 0.0
      %501 = vmatpush2.msra.mxu0 0.0
      %502 = vmatprep.subr.mxu0 0.0
      %503 = vmatpush2.msra.mxu0 0.0
      %504 = vmatprep.subr.mxu0 0.0
      %505 = vmatpush2.msra.mxu0 0.0
      %506 = vmatprep.subr.mxu0 0.0
      %507 = vmatpush2.msra.mxu0 0.0
      %508 = vmatprep.subr.mxu0 0.0
      %509 = vmatpush2.msra.mxu0 0.0
      %510 = vmatprep.subr.mxu0 0.0
      %511 = vmatpush2.msra.mxu0 0.0
      %512 = vmatprep.subr.mxu0 0.0
      %513 = vmatpush2.msra.mxu0 0.0
      %514 = vmatprep.mubr.f32.mxu0 0.0
      %515 = vmatmul.mubr.f32.gmra.mxu0 %v426
      %v516 = vpop.f32.mrf.mxu0
      %v517 = vadd.f32 %v448, %v516
      %v518 = vpop.f32.mrf.mxu0
      %519 = vdwg.mxu0
      %v520 = vmul.f32 %v517, 0.5
      %v521 = vmul.f32 %v517, 0.70710677
      %v522 = verf.f32.pop %v521
      %v523 = vadd.f32 %v522, 1.0
      %v524 = vmul.f32 %v520, %v523
      %v525 = vld [vmem:[%s5] sm:$0xff]
      %v526 = vld [vmem:[%s5 + $0x8] sm:$0xff]
      %v527 = vld [vmem:[%s5 + $0x10] sm:$0xff]
      %v528 = vld [vmem:[%s5 + $0x18] sm:$0xff]
      %v529 = vld [vmem:[%s5 + $0x20] sm:$0xff]
      %v530 = vld [vmem:[%s5 + $0x28] sm:$0xff]
      %v531 = vld [vmem:[%s5 + $0x30] sm:$0xff]
      %v532 = vld [vmem:[%s5 + $0x38] sm:$0xff]
      %v533 = vld [vmem:[%s5 + $0x40] sm:$0xff]
      %v534 = vld [vmem:[%s5 + $0x48] sm:$0xff]
      %v535 = vld [vmem:[%s5 + $0x50] sm:$0xff]
      %v536 = vld [vmem:[%s5 + $0x58] sm:$0xff]
      %v537 = vld [vmem:[%s5 + $0x60] sm:$0xff]
      %v538 = vld [vmem:[%s5 + $0x68] sm:$0xff]
      %v539 = vld [vmem:[%s5 + $0x70] sm:$0xff]
      %v540 = vld [vmem:[%s5 + $0x78] sm:$0xff]
      %v541 = vld [vmem:[%s6] sm:$0x1]
      %v543 = vlaneseq
      %v544 = vshrl.u32 %v543, 7
      %v545 = vsub.s32 0, %v544
      %v546 = vrot.slane %v541, %v545
      %548 = vmatprep.subr.mxu0 0.0
      %549 = vmatpush1.msra.mxu0 %v540
      %550 = vmatprep.subr.mxu0 0.0
      %551 = vmatpush1.msra.mxu0 %v539
      %552 = vmatprep.subr.mxu0 0.0
      %553 = vmatpush1.msra.mxu0 %v538
      %554 = vmatprep.subr.mxu0 0.0
      %555 = vmatpush1.msra.mxu0 %v537
      %556 = vmatprep.subr.mxu0 0.0
      %557 = vmatpush1.msra.mxu0 %v536
      %558 = vmatprep.subr.mxu0 0.0
      %559 = vmatpush1.msra.mxu0 %v535
      %560 = vmatprep.subr.mxu0 0.0
      %561 = vmatpush1.msra.mxu0 %v534
      %562 = vmatprep.subr.mxu0 0.0
      %563 = vmatpush1.msra.mxu0 %v533
      %564 = vmatprep.subr.mxu0 0.0
      %565 = vmatpush1.msra.mxu0 %v532
      %566 = vmatprep.subr.mxu0 0.0
      %567 = vmatpush1.msra.mxu0 %v531
      %568 = vmatprep.subr.mxu0 0.0
      %569 = vmatpush1.msra.mxu0 %v530
      %570 = vmatprep.subr.mxu0 0.0
      %571 = vmatpush1.msra.mxu0 %v529
      %572 = vmatprep.subr.mxu0 0.0
      %573 = vmatpush1.msra.mxu0 %v528
      %574 = vmatprep.subr.mxu0 0.0
      %575 = vmatpush1.msra.mxu0 %v527
      %576 = vmatprep.subr.mxu0 0.0
      %577 = vmatpush1.msra.mxu0 %v526
      %578 = vmatprep.subr.mxu0 0.0
      %579 = vmatpush1.msra.mxu0 %v525
      %580 = vmatprep.subr.mxu0 0.0
      %581 = vmatpush2.msra.mxu0 0.0
      %582 = vmatprep.subr.mxu0 0.0
      %583 = vmatpush2.msra.mxu0 0.0
      %584 = vmatprep.subr.mxu0 0.0
      %585 = vmatpush2.msra.mxu0 0.0
      %586 = vmatprep.subr.mxu0 0.0
      %587 = vmatpush2.msra.mxu0 0.0
      %588 = vmatprep.subr.mxu0 0.0
      %589 = vmatpush2.msra.mxu0 0.0
      %590 = vmatprep.subr.mxu0 0.0
      %591 = vmatpush2.msra.mxu0 0.0
      %592 = vmatprep.subr.mxu0 0.0
      %593 = vmatpush2.msra.mxu0 0.0
      %594 = vmatprep.subr.mxu0 0.0
      %595 = vmatpush2.msra.mxu0 0.0
      %596 = vmatprep.subr.mxu0 0.0
      %597 = vmatpush2.msra.mxu0 0.0
      %598 = vmatprep.subr.mxu0 0.0
      %599 = vmatpush2.msra.mxu0 0.0
      %600 = vmatprep.subr.mxu0 0.0
      %601 = vmatpush2.msra.mxu0 0.0
      %602 = vmatprep.subr.mxu0 0.0
      %603 = vmatpush2.msra.mxu0 0.0
      %604 = vmatprep.subr.mxu0 0.0
      %605 = vmatpush2.msra.mxu0 0.0
      %606 = vmatprep.subr.mxu0 0.0
      %607 = vmatpush2.msra.mxu0 0.0
      %608 = vmatprep.subr.mxu0 0.0
      %609 = vmatpush2.msra.mxu0 0.0
      %610 = vmatprep.subr.mxu0 0.0
      %611 = vmatpush2.msra.mxu0 0.0
      %612 = vmatprep.mubr.f32.mxu0 0.0
      %613 = vmatmul.mubr.f32.gmra.mxu0 %v524
      %v614 = vpop.f32.mrf.mxu0
      %v615 = vadd.f32 %v546, %v614
      %v616 = vpop.f32.mrf.mxu0
      %617 = vdwg.mxu0
      %v618 = vadd.f32 %v328, %v615
      %619 = vadd.xlane.f32.xlu0 %v618
      %v620 = vpop.xlane.xlu0 %619
      %v621 = vmul.f32 %v620, 0.03125
      %v622 = vsub.f32 %v618, %v621
      %v623 = vlaneseq
      %v624 = vand.u32 %v623, 127
      %vm625 = vcmp.lt.s32.totalorder %v624, 32
      %v626 = vsel %vm625, %v622, 0.0
      %v627 = vmul.f32 %v626, %v626
      %628 = vadd.xlane.f32.xlu0 %v627
      %v629 = vpop.xlane.xlu0 %628
      %v630 = vmul.f32 %v629, 0.03125
      %v631 = vadd.f32 %v630, 1e-05
      %v632 = vrsqrt.pop %v631
      %v633 = vmul.f32 %v626, %v632
      %v634 = vld [vmem:[%s7] sm:$0x1]
      %v636 = vlaneseq
      %v637 = vshrl.u32 %v636, 7
      %v638 = vsub.s32 0, %v637
      %v639 = vrot.slane %v634, %v638
      %v641 = vmul.f32 %v633, %v639
      %v642 = vld [vmem:[%s8] sm:$0x1]
      %v644 = vlaneseq
      %v645 = vshrl.u32 %v644, 7
      %v646 = vsub.s32 0, %v645
      %v647 = vrot.slane %v642, %v646
      %v649 = vadd.f32 %v641, %v647
      %650 = vst [vmem:[%s327] sm:$0xff] %v649
      %p651 = scmp.lt.s32.totalorder %s20, 1
      %s652 = scalar_select %p651, %s20, 1
      %s653 = smul.addr %s652, 8
      %s654 = scalar_lea.vmem %s9, %s653
      // Predicated region
      $region57: #{mlp_adapter_forward.1} parent=55 // pred_check
        %p655 = pneg %p232
      $region58: #{mlp_adapter_forward.1} parent=55 // pred_check_branch
        %657 = sbr.rel (%p655) target = $region60
      $region59: #{mlp_adapter_forward.1} parent=55 // pred_region
        _
      $region60: #{mlp_adapter_forward.1} parent=55 // pred_fallthru
        _
    $region56: #{mlp_adapter_forward.1} parent=5 // pred_fallthru
      _
    %p658 = scmp.le.s32.totalorder 2, %s15
    // Predicated region
    $region61: #{mlp_adapter_forward.1} parent=5 // pred_check
      %p659 = pneg %p658
    $region62: #{mlp_adapter_forward.1} parent=5 // pred_check_branch
      %661 = sbr.rel (%p659) target = $region64
    $region63: #{mlp_adapter_forward.1} parent=5 // pred_region
      %s662 = ssub.s32 %s15, 2
      // Predicated region
      $region65: #{mlp_adapter_forward.1} parent=63 // pred_check
        %p663 = pneg %p238
      $region66: #{mlp_adapter_forward.1} parent=63 // pred_check_branch
        %665 = sbr.rel (%p663) target = $region68
      $region67: #{mlp_adapter_forward.1} parent=63 // pred_region
        %p666 = scmp.lt.s32.totalorder %s21, 1
        %s667 = scalar_select %p666, %s21, 1
        %s668 = smul.addr %s667, 8
        %s669 = scalar_lea.vmem %s9, %s668
      $region68: #{mlp_adapter_forward.1} parent=63 // pred_fallthru
        _
    $region64: #{mlp_adapter_forward.1} parent=5 // pred_fallthru
      _
  $region6: #{mlp_adapter_forward.1} parent=0 // loop_footer
    %s19 = sadd.s32 1, %s15
  $region7: #{mlp_adapter_forward.1} parent=0 // loop_footer_branch
    %14 = sbr.rel target = $region3
  $region8: #{mlp_adapter_forward.1} parent=0 // loop_exit
    _

</llo_original>
